<compile_context>
chip_gen: v7x
topology: tpu7x:2x2x1
jax: 0.10.0
libtpu: 0.0.40
codegen_flags: <defaults>
</compile_context>

<pallas_src>
import functools

import jax
import jax.numpy as jnp
import numpy as np
from jax.experimental import pallas as pl
from jax.experimental.pallas import tpu as pltpu


def _round_up(x, m):
    return ((x + m - 1) // m) * m


# ----------------------------- Pallas kernels ------------------------------ #

def _linear_relu_kernel(z_ref, w_ref, b_ref, o_ref):
    acc = jnp.dot(z_ref[...], w_ref[...], preferred_element_type=jnp.float32)
    acc = jnp.maximum(acc + b_ref[...], 0.0)
    o_ref[...] = acc.astype(o_ref.dtype)


def linear_relu(z, w, b, out_dtype=jnp.bfloat16):
    """z (B, zdim) @ w (zdim, D*D*h0) + b, fused ReLU.  Weight columns are
    pre-permuted to NHWC feature order so no transpose is needed afterwards.
    Tiny at these sizes; tile over B/N if batch ever becomes large."""
    B = z.shape[0]
    N = w.shape[1]
    return pl.pallas_call(
        _linear_relu_kernel,
        out_shape=jax.ShapeDtypeStruct((B, N), out_dtype),
        in_specs=[pl.BlockSpec(memory_space=pltpu.MemorySpace.VMEM)] * 3,
        out_specs=pl.BlockSpec(memory_space=pltpu.MemorySpace.VMEM),
    )(z.astype(jnp.bfloat16), w, b.reshape(1, N))


def _conv9_kernel(x_ref, w_ref, b_ref, o_ref, *, H, W, cp4, th, post_act):
    # x_ref: (1, (H+2)*(W+2)+8, Cin) bf16  zero-pad-1 image, rows flattened
    # w_ref: (9, Cin, 4*Cp)          bf16  fused 3x3-neighborhood weight
    # b_ref: (1, 4*Cp)               f32   bias tiled over the 4 phases
    # o_ref: (1, H*(W+2), 4*Cp)      bf16  phase-major lanes; cols W..W+1 junk
    wp2 = W + 2
    m = th * wp2                      # rows per block (multiple of 8)
    bias = b_ref[...]
    for blk in range(H // th):        # static unroll over row blocks
        y0 = blk * th
        acc = jnp.zeros((m, cp4), jnp.float32)
        for dy in range(3):           # 9 shifted contiguous slices of the slab
            for dx in range(3):
                start = (y0 + dy) * wp2 + dx            # static offset
                lhs = x_ref[0, pl.ds(start, m), :]      # (m, Cin) bf16
                acc = acc + jnp.dot(lhs, w_ref[dy * 3 + dx],
                                    preferred_element_type=jnp.float32)
        acc = acc + bias
        if post_act == "relu":
            acc = jnp.maximum(acc, 0.0)
        else:  # sigmoid (EUP; hidden under HBM traffic)
            acc = jax.nn.sigmoid(acc)
        # one lane-dense, sublane-aligned store per row block
        o_ref[0, pl.ds(y0 * wp2, m), :] = acc.astype(o_ref.dtype)


# ------------------------------ JAX glue code ------------------------------ #

def conv_transpose_2x(x_nhwc, w9, b9, cout, *, post_act):
    """PyTorch ConvTranspose2d(Cin, Cout, 4, stride=2, padding=1) with a fused
    ReLU/Sigmoid epilogue; NHWC in / NHWC out.  Taps are built in-kernel from
    the raw padded input; all 4 parity phases share one fused matmul N."""
    B, H, W, Cin = x_nhwc.shape
    wp2 = W + 2
    cp4 = w9.shape[2]
    cp = cp4 // 4
    P = (H + 2) * wp2 + 8            # +8 zero rows so every tap slice stays in bounds

    xp = jnp.pad(x_nhwc.astype(jnp.bfloat16), ((0, 0), (1, 1), (1, 1), (0, 0)))
    xf = jnp.pad(xp.reshape(B, (H + 2) * wp2, Cin), ((0, 0), (0, 8), (0, 0)))

    th = H                           # rows per in-kernel block; th | H, keeps M~<=256
    while th > 1 and th * wp2 > 256:
        th //= 2

    kernel = functools.partial(_conv9_kernel, H=H, W=W, cp4=cp4, th=th,
                               post_act=post_act)
    out_rows = H * wp2
    cost = pl.CostEstimate(
        flops=2 * 9 * B * out_rows * Cin * cp4,
        transcendentals=(B * out_rows * cp4) if post_act == "sigmoid" else 0,
        bytes_accessed=xf.size * 2 + w9.size * 2 + b9.size * 4
        + B * out_rows * cp4 * 2)

    out = pl.pallas_call(
        kernel,
        out_shape=jax.ShapeDtypeStruct((B, out_rows, cp4), jnp.bfloat16),
        grid_spec=pltpu.PrefetchScalarGridSpec(
            num_scalar_prefetch=0,
            grid=(B,),
            in_specs=[
                pl.BlockSpec((1, P, Cin), lambda b: (b, 0, 0)),      # per-image slab
                pl.BlockSpec((9, Cin, cp4), lambda b: (0, 0, 0)),    # resident weight
                pl.BlockSpec((1, cp4), lambda b: (0, 0)),            # resident bias
            ],
            out_specs=pl.BlockSpec((1, out_rows, cp4), lambda b: (b, 0, 0)),
        ),
        compiler_params=pltpu.CompilerParams(dimension_semantics=("parallel",)),
        cost_estimate=cost,
    )(xf, w9, b9)

    # Depth-to-space + drop junk columns / lane padding.  Pure data movement;
    # under jit XLA fuses this with the next layer's pad + flatten.
    o = out.reshape(B, H, wp2, 2, 2, cp)[:, :, :W, :, :, :cout]
    o = jnp.transpose(o, (0, 1, 3, 2, 4, 5)).reshape(B, 2 * H, 2 * W, cout)
    return o


# --------------------------- parameters & forward --------------------------- #

def init_decoder_params(key, zdim, img_shape, hidden_dims):
    """PyTorch-layout parameters (used directly by the pure-JAX reference)."""
    channel_out, h, _ = img_shape
    init_dim = h // 2 ** len(hidden_dims)
    C = init_dim ** 2
    keys = jax.random.split(key, 2 + 2 * len(hidden_dims))
    params = {
        "lin_w": jax.random.normal(keys[0], (zdim, C * hidden_dims[0]), jnp.float32) * 0.1,
        "lin_b": jax.random.normal(keys[1], (C * hidden_dims[0],), jnp.float32) * 0.01,
    }
    chans = list(hidden_dims[1:]) + [channel_out]
    in_c = hidden_dims[0]
    convs = []
    for i, out_c in enumerate(chans):
        wk, bk = keys[2 + 2 * i], keys[3 + 2 * i]
        w = jax.random.normal(wk, (in_c, out_c, 4, 4), jnp.float32) / np.sqrt(in_c * 16.0)
        b = jax.random.normal(bk, (out_c,), jnp.float32) * 0.01
        convs.append((w, b))
        in_c = out_c
    params["convs"] = convs
    return params, init_dim


def prepare_pallas_params(params, hidden_dims, init_dim):
    """One-time conversion: NHWC-permuted linear weight, and per-layer fused
    3x3-neighborhood weights (9, Cin, 4*Cp) with zero entries for taps a phase
    does not use.  Phase p = 2*py+px uses 3x3 offset (Dy,Dx) = (py+dy, px+dx),
    with kernel tap w_t[:, :, 3-py-2dy, 3-px-2dx]."""
    zdim = params["lin_w"].shape[0]
    h0, D = hidden_dims[0], init_dim
    lw = params["lin_w"].reshape(zdim, h0, D, D)
    lw = jnp.transpose(lw, (0, 2, 3, 1)).reshape(zdim, D * D * h0).astype(jnp.bfloat16)
    lb = jnp.transpose(params["lin_b"].reshape(h0, D, D), (1, 2, 0)).reshape(D * D * h0)

    conv_w, conv_b, couts = [], [], []
    for (w, b) in params["convs"]:
        cin, cout = w.shape[0], w.shape[1]
        cp = _round_up(cout, 32)          # 4*cp multiple of 128 -> lane-dense stores
        w_np = np.asarray(w, np.float32)
        w9 = np.zeros((9, cin, 4 * cp), np.float32)
        for py in range(2):
            for px in range(2):
                p = 2 * py + px
                for dy in range(2):
                    for dx in range(2):
                        t = (py + dy) * 3 + (px + dx)
                        w9[t, :, p * cp:p * cp + cout] = \
                            w_np[:, :, 3 - py - 2 * dy, 3 - px - 2 * dx]
        bp = np.tile(np.pad(np.asarray(b, np.float32), (0, cp - cout)), 4)
        conv_w.append(jnp.asarray(w9, jnp.bfloat16))
        conv_b.append(jnp.asarray(bp.reshape(1, 4 * cp), jnp.float32))
        couts.append(cout)

    pparams = {"lin_w": lw, "lin_b": lb.astype(jnp.float32),
               "conv_w": tuple(conv_w), "conv_b": tuple(conv_b)}
    return pparams, tuple(couts)


def decoder_forward(pparams, z, *, couts, hidden_dims, init_dim):
    """Pallas forward pass (arch_type == 0). Returns NCHW f32 like PyTorch."""
    B = z.shape[0]
    x = linear_relu(z, pparams["lin_w"], pparams["lin_b"])       # (B, D*D*h0) NHWC order
    x = x.reshape(B, init_dim, init_dim, hidden_dims[0])
    n = len(couts)
    for i in range(n):
        post = "sigmoid" if i == n - 1 else "relu"               # fused epilogues
        x = conv_transpose_2x(x, pparams["conv_w"][i], pparams["conv_b"][i],
                              couts[i], post_act=post)
    return jnp.transpose(x, (0, 3, 1, 2)).astype(jnp.float32)    # -> NCHW f32


def decoder_forward_ref(params, z, img_shape, hidden_dims, init_dim):
    """Pure-JAX reference (matches PyTorch semantics) for correctness check."""
    B = z.shape[0]
    x = jnp.maximum(z @ params["lin_w"] + params["lin_b"], 0.0)
    x = x.reshape(B, hidden_dims[0], init_dim, init_dim)
    n = len(params["convs"])
    for i, (w, b) in enumerate(params["convs"]):
        if i > 0:
            x = jnp.maximum(x, 0.0)
        w_conv = jnp.transpose(w[:, :, ::-1, ::-1], (1, 0, 2, 3))   # (Cout, Cin, KH, KW)
        x = jax.lax.conv_general_dilated(
            x, w_conv, window_strides=(1, 1), padding=((2, 2), (2, 2)),
            lhs_dilation=(2, 2), dimension_numbers=("NCHW", "OIHW", "NCHW"),
            precision=jax.lax.Precision.HIGHEST,
        ) + b.reshape(1, -1, 1, 1)
        if i == n - 1:
            x = jax.nn.sigmoid(x)
    return x


# ----------------------------------- main ----------------------------------- #

if __name__ == "__main__":
    zdim = 8
    img_shape = (3, 16, 16)          # (channel_out, h, h)
    hidden_dims = [32, 16]           # small version of the default [256,128,64,32]
    batch = 2

    key = jax.random.PRNGKey(0)
    pkey, zkey = jax.random.split(key)
    params, init_dim = init_decoder_params(pkey, zdim, img_shape, hidden_dims)
    pparams, couts = prepare_pallas_params(params, hidden_dims, init_dim)
    z = jax.random.normal(zkey, (batch, zdim), jnp.float32)

    fwd = jax.jit(functools.partial(decoder_forward, couts=couts,
                                    hidden_dims=tuple(hidden_dims),
                                    init_dim=init_dim))
    out = jax.block_until_ready(fwd(pparams, z))

    ref = jax.block_until_ready(
        decoder_forward_ref(params, z, img_shape, hidden_dims, init_dim))

    assert out.shape == (batch, img_shape[0], img_shape[1], img_shape[2]), out.shape
    out_np = np.asarray(out, dtype=np.float32)
    ref_np = np.asarray(ref, dtype=np.float32)
    if not np.allclose(out_np, ref_np, atol=2e-2, rtol=2e-2):
        raise AssertionError(
            f"Pallas decoder mismatch; max abs err {np.max(np.abs(out_np - ref_np))}")

    print("KERNEL_OK")
</pallas_src>

<mosaic_0001>
module attributes {stable_mosaic.version = 11 : i64} {
  func.func @_linear_relu_kernel(%arg0: memref<2x8xbf16, #tpu.memory_space<vmem>>, %arg1: memref<8x512xbf16, #tpu.memory_space<vmem>>, %arg2: memref<1x512xf32, #tpu.memory_space<vmem>>, %arg3: memref<2x512xbf16, #tpu.memory_space<vmem>>) attributes {dimension_semantics = [], scalar_prefetch = 0 : i64, scratch_operands = 0 : i64, tpu.core_type = #tpu.core_type<tc>} {
    %c0 = arith.constant 0 : index
    %c0_0 = arith.constant 0 : index
    %0 = vector.load %arg0[%c0, %c0_0] : memref<2x8xbf16, #tpu.memory_space<vmem>>, vector<2x8xbf16>
    %c0_1 = arith.constant 0 : index
    %c0_2 = arith.constant 0 : index
    %1 = vector.load %arg1[%c0_1, %c0_2] : memref<8x512xbf16, #tpu.memory_space<vmem>>, vector<8x512xbf16>
    %cst = arith.constant dense<0.000000e+00> : vector<2x512xf32>
    %2 = tpu.matmul %0, %1, %cst {dimension_numbers = #tpu.dot_dimension_numbers<[1], [0], [0], [1], [0, 0, 1, 1], [], []>} : vector<2x8xbf16>, vector<8x512xbf16>, vector<2x512xf32> -> vector<2x512xf32>
    %c0_3 = arith.constant 0 : index
    %c0_4 = arith.constant 0 : index
    %3 = vector.load %arg2[%c0_3, %c0_4] : memref<1x512xf32, #tpu.memory_space<vmem>>, vector<1x512xf32>
    %4 = vector.broadcast %3 : vector<1x512xf32> to vector<2x512xf32>
    %5 = arith.addf %2, %4 : vector<2x512xf32>
    %cst_5 = arith.constant 0.000000e+00 : f32
    %6 = vector.broadcast %cst_5 : f32 to vector<2x512xf32>
    %7 = arith.maximumf %5, %6 : vector<2x512xf32>
    %8 = arith.truncf %7 : vector<2x512xf32> to vector<2x512xbf16>
    %c0_6 = arith.constant 0 : index
    %c0_7 = arith.constant 0 : index
    %9 = vector.load %arg3[%c0_6, %c0_7] : memref<2x512xbf16, #tpu.memory_space<vmem>>, vector<2x512xbf16>
    tpu.vector_store %arg3[%c0_6, %c0_7], %8 {strides = array<i32>} : memref<2x512xbf16, #tpu.memory_space<vmem>>, vector<2x512xbf16>,
    return
  }
}

module attributes {stable_mosaic.version = 11 : i64} {
  func.func @_conv9_kernel(%arg0: i32, %arg1: memref<1x44x32xbf16, #tpu.memory_space<vmem>>, %arg2: memref<9x32x128xbf16, #tpu.memory_space<vmem>>, %arg3: memref<1x128xf32, #tpu.memory_space<vmem>>, %arg4: memref<1x24x128xbf16, #tpu.memory_space<vmem>>) attributes {dimension_semantics = [#tpu.dimension_semantics<parallel>], iteration_bounds = array<i64: 2>, scalar_prefetch = 0 : i64, scratch_operands = 0 : i64, tpu.core_type = #tpu.core_type<tc>, window_params = [{transform_indices = @transform_0, window_bounds = array<i64: 1, 44, 32>}, {pipeline_mode = #tpu.pipeline_mode<synchronous>, transform_indices = @transform_1, window_bounds = array<i64: 9, 32, 128>}, {pipeline_mode = #tpu.pipeline_mode<synchronous>, transform_indices = @transform_2, window_bounds = array<i64: 1, 128>}, {transform_indices = @transform_3, window_bounds = array<i64: 1, 24, 128>}]} {
    %c0 = arith.constant 0 : index
    %c0_0 = arith.constant 0 : index
    %0 = vector.load %arg3[%c0, %c0_0] : memref<1x128xf32, #tpu.memory_space<vmem>>, vector<1x128xf32>
    %cst = arith.constant 0.000000e+00 : f32
    %1 = vector.broadcast %cst : f32 to vector<24x128xf32>
    %c0_1 = arith.constant 0 : index
    %c0_2 = arith.constant 0 : index
    %c0_3 = arith.constant 0 : index
    %2 = vector.load %arg1[%c0_1, %c0_2, %c0_3] : memref<1x44x32xbf16, #tpu.memory_space<vmem>>, vector<1x24x32xbf16>
    %3 = vector.shape_cast %2 : vector<1x24x32xbf16> to vector<24x32xbf16>
    %c0_4 = arith.constant 0 : index
    %c0_5 = arith.constant 0 : index
    %c0_6 = arith.constant 0 : index
    %4 = vector.load %arg2[%c0_4, %c0_5, %c0_6] : memref<9x32x128xbf16, #tpu.memory_space<vmem>>, vector<1x32x128xbf16>
    %5 = vector.shape_cast %4 : vector<1x32x128xbf16> to vector<32x128xbf16>
    %cst_7 = arith.constant dense<0.000000e+00> : vector<24x128xf32>
    %6 = tpu.matmul %3, %5, %cst_7 {dimension_numbers = #tpu.dot_dimension_numbers<[1], [0], [0], [1], [0, 0, 1, 1], [], []>} : vector<24x32xbf16>, vector<32x128xbf16>, vector<24x128xf32> -> vector<24x128xf32>
    %7 = arith.addf %1, %6 : vector<24x128xf32>
    %c0_8 = arith.constant 0 : index
    %c1 = arith.constant 1 : index
    %c0_9 = arith.constant 0 : index
    %8 = vector.load %arg1[%c0_8, %c1, %c0_9] : memref<1x44x32xbf16, #tpu.memory_space<vmem>>, vector<1x24x32xbf16>
    %9 = vector.shape_cast %8 : vector<1x24x32xbf16> to vector<24x32xbf16>
    %c1_10 = arith.constant 1 : index
    %c0_11 = arith.constant 0 : index
    %c0_12 = arith.constant 0 : index
    %10 = vector.load %arg2[%c1_10, %c0_11, %c0_12] : memref<9x32x128xbf16, #tpu.memory_space<vmem>>, vector<1x32x128xbf16>
    %11 = vector.shape_cast %10 : vector<1x32x128xbf16> to vector<32x128xbf16>
    %cst_13 = arith.constant dense<0.000000e+00> : vector<24x128xf32>
    %12 = tpu.matmul %9, %11, %cst_13 {dimension_numbers = #tpu.dot_dimension_numbers<[1], [0], [0], [1], [0, 0, 1, 1], [], []>} : vector<24x32xbf16>, vector<32x128xbf16>, vector<24x128xf32> -> vector<24x128xf32>
    %13 = arith.addf %7, %12 : vector<24x128xf32>
    %c0_14 = arith.constant 0 : index
    %c2 = arith.constant 2 : index
    %c0_15 = arith.constant 0 : index
    %14 = vector.load %arg1[%c0_14, %c2, %c0_15] : memref<1x44x32xbf16, #tpu.memory_space<vmem>>, vector<1x24x32xbf16>
    %15 = vector.shape_cast %14 : vector<1x24x32xbf16> to vector<24x32xbf16>
    %c2_16 = arith.constant 2 : index
    %c0_17 = arith.constant 0 : index
    %c0_18 = arith.constant 0 : index
    %16 = vector.load %arg2[%c2_16, %c0_17, %c0_18] : memref<9x32x128xbf16, #tpu.memory_space<vmem>>, vector<1x32x128xbf16>
    %17 = vector.shape_cast %16 : vector<1x32x128xbf16> to vector<32x128xbf16>
    %cst_19 = arith.constant dense<0.000000e+00> : vector<24x128xf32>
    %18 = tpu.matmul %15, %17, %cst_19 {dimension_numbers = #tpu.dot_dimension_numbers<[1], [0], [0], [1], [0, 0, 1, 1], [], []>} : vector<24x32xbf16>, vector<32x128xbf16>, vector<24x128xf32> -> vector<24x128xf32>
    %19 = arith.addf %13, %18 : vector<24x128xf32>
    %c0_20 = arith.constant 0 : index
    %c6 = arith.constant 6 : index
    %c0_21 = arith.constant 0 : index
    %20 = vector.load %arg1[%c0_20, %c6, %c0_21] : memref<1x44x32xbf16, #tpu.memory_space<vmem>>, vector<1x24x32xbf16>
    %21 = vector.shape_cast %20 : vector<1x24x32xbf16> to vector<24x32xbf16>
    %c3 = arith.constant 3 : index
    %c0_22 = arith.constant 0 : index
    %c0_23 = arith.constant 0 : index
    %22 = vector.load %arg2[%c3, %c0_22, %c0_23] : memref<9x32x128xbf16, #tpu.memory_space<vmem>>, vector<1x32x128xbf16>
    %23 = vector.shape_cast %22 : vector<1x32x128xbf16> to vector<32x128xbf16>
    %cst_24 = arith.constant dense<0.000000e+00> : vector<24x128xf32>
    %24 = tpu.matmul %21, %23, %cst_24 {dimension_numbers = #tpu.dot_dimension_numbers<[1], [0], [0], [1], [0, 0, 1, 1], [], []>} : vector<24x32xbf16>, vector<32x128xbf16>, vector<24x128xf32> -> vector<24x128xf32>
    %25 = arith.addf %19, %24 : vector<24x128xf32>
    %c0_25 = arith.constant 0 : index
    %c7 = arith.constant 7 : index
    %c0_26 = arith.constant 0 : index
    %26 = vector.load %arg1[%c0_25, %c7, %c0_26] : memref<1x44x32xbf16, #tpu.memory_space<vmem>>, vector<1x24x32xbf16>
    %27 = vector.shape_cast %26 : vector<1x24x32xbf16> to vector<24x32xbf16>
    %c4 = arith.constant 4 : index
    %c0_27 = arith.constant 0 : index
    %c0_28 = arith.constant 0 : index
    %28 = vector.load %arg2[%c4, %c0_27, %c0_28] : memref<9x32x128xbf16, #tpu.memory_space<vmem>>, vector<1x32x128xbf16>
    %29 = vector.shape_cast %28 : vector<1x32x128xbf16> to vector<32x128xbf16>
    %cst_29 = arith.constant dense<0.000000e+00> : vector<24x128xf32>
    %30 = tpu.matmul %27, %29, %cst_29 {dimension_numbers = #tpu.dot_dimension_numbers<[1], [0], [0], [1], [0, 0, 1, 1], [], []>} : vector<24x32xbf16>, vector<32x128xbf16>, vector<24x128xf32> -> vector<24x128xf32>
    %31 = arith.addf %25, %30 : vector<24x128xf32>
    %c0_30 = arith.constant 0 : index
    %c8 = arith.constant 8 : index
    %c0_31 = arith.constant 0 : index
    %32 = vector.load %arg1[%c0_30, %c8, %c0_31] : memref<1x44x32xbf16, #tpu.memory_space<vmem>>, vector<1x24x32xbf16>
    %33 = vector.shape_cast %32 : vector<1x24x32xbf16> to vector<24x32xbf16>
    %c5 = arith.constant 5 : index
    %c0_32 = arith.constant 0 : index
    %c0_33 = arith.constant 0 : index
    %34 = vector.load %arg2[%c5, %c0_32, %c0_33] : memref<9x32x128xbf16, #tpu.memory_space<vmem>>, vector<1x32x128xbf16>
    %35 = vector.shape_cast %34 : vector<1x32x128xbf16> to vector<32x128xbf16>
    %cst_34 = arith.constant dense<0.000000e+00> : vector<24x128xf32>
    %36 = tpu.matmul %33, %35, %cst_34 {dimension_numbers = #tpu.dot_dimension_numbers<[1], [0], [0], [1], [0, 0, 1, 1], [], []>} : vector<24x32xbf16>, vector<32x128xbf16>, vector<24x128xf32> -> vector<24x128xf32>
    %37 = arith.addf %31, %36 : vector<24x128xf32>
    %c0_35 = arith.constant 0 : index
    %c12 = arith.constant 12 : index
    %c0_36 = arith.constant 0 : index
    %38 = vector.load %arg1[%c0_35, %c12, %c0_36] : memref<1x44x32xbf16, #tpu.memory_space<vmem>>, vector<1x24x32xbf16>
    %39 = vector.shape_cast %38 : vector<1x24x32xbf16> to vector<24x32xbf16>
    %c6_37 = arith.constant 6 : index
    %c0_38 = arith.constant 0 : index
    %c0_39 = arith.constant 0 : index
    %40 = vector.load %arg2[%c6_37, %c0_38, %c0_39] : memref<9x32x128xbf16, #tpu.memory_space<vmem>>, vector<1x32x128xbf16>
    %41 = vector.shape_cast %40 : vector<1x32x128xbf16> to vector<32x128xbf16>
    %cst_40 = arith.constant dense<0.000000e+00> : vector<24x128xf32>
    %42 = tpu.matmul %39, %41, %cst_40 {dimension_numbers = #tpu.dot_dimension_numbers<[1], [0], [0], [1], [0, 0, 1, 1], [], []>} : vector<24x32xbf16>, vector<32x128xbf16>, vector<24x128xf32> -> vector<24x128xf32>
    %43 = arith.addf %37, %42 : vector<24x128xf32>
    %c0_41 = arith.constant 0 : index
    %c13 = arith.constant 13 : index
    %c0_42 = arith.constant 0 : index
    %44 = vector.load %arg1[%c0_41, %c13, %c0_42] : memref<1x44x32xbf16, #tpu.memory_space<vmem>>, vector<1x24x32xbf16>
    %45 = vector.shape_cast %44 : vector<1x24x32xbf16> to vector<24x32xbf16>
    %c7_43 = arith.constant 7 : index
    %c0_44 = arith.constant 0 : index
    %c0_45 = arith.constant 0 : index
    %46 = vector.load %arg2[%c7_43, %c0_44, %c0_45] : memref<9x32x128xbf16, #tpu.memory_space<vmem>>, vector<1x32x128xbf16>
    %47 = vector.shape_cast %46 : vector<1x32x128xbf16> to vector<32x128xbf16>
    %cst_46 = arith.constant dense<0.000000e+00> : vector<24x128xf32>
    %48 = tpu.matmul %45, %47, %cst_46 {dimension_numbers = #tpu.dot_dimension_numbers<[1], [0], [0], [1], [0, 0, 1, 1], [], []>} : vector<24x32xbf16>, vector<32x128xbf16>, vector<24x128xf32> -> vector<24x128xf32>
    %49 = arith.addf %43, %48 : vector<24x128xf32>
    %c0_47 = arith.constant 0 : index
    %c14 = arith.constant 14 : index
    %c0_48 = arith.constant 0 : index
    %50 = vector.load %arg1[%c0_47, %c14, %c0_48] : memref<1x44x32xbf16, #tpu.memory_space<vmem>>, vector<1x24x32xbf16>
    %51 = vector.shape_cast %50 : vector<1x24x32xbf16> to vector<24x32xbf16>
    %c8_49 = arith.constant 8 : index
    %c0_50 = arith.constant 0 : index
    %c0_51 = arith.constant 0 : index
    %52 = vector.load %arg2[%c8_49, %c0_50, %c0_51] : memref<9x32x128xbf16, #tpu.memory_space<vmem>>, vector<1x32x128xbf16>
    %53 = vector.shape_cast %52 : vector<1x32x128xbf16> to vector<32x128xbf16>
    %cst_52 = arith.constant dense<0.000000e+00> : vector<24x128xf32>
    %54 = tpu.matmul %51, %53, %cst_52 {dimension_numbers = #tpu.dot_dimension_numbers<[1], [0], [0], [1], [0, 0, 1, 1], [], []>} : vector<24x32xbf16>, vector<32x128xbf16>, vector<24x128xf32> -> vector<24x128xf32>
    %55 = arith.addf %49, %54 : vector<24x128xf32>
    %56 = vector.broadcast %0 : vector<1x128xf32> to vector<24x128xf32>
    %57 = arith.addf %55, %56 : vector<24x128xf32>
    %cst_53 = arith.constant 0.000000e+00 : f32
    %58 = vector.broadcast %cst_53 : f32 to vector<24x128xf32>
    %59 = arith.maximumf %57, %58 : vector<24x128xf32>
    %60 = arith.truncf %59 : vector<24x128xf32> to vector<24x128xbf16>
    %c0_54 = arith.constant 0 : index
    %c0_55 = arith.constant 0 : index
    %c0_56 = arith.constant 0 : index
    %61 = vector.load %arg4[%c0_54, %c0_55, %c0_56] : memref<1x24x128xbf16, #tpu.memory_space<vmem>>, vector<1x24x128xbf16>
    %62 = vector.shape_cast %61 : vector<1x24x128xbf16> to vector<24x128xbf16>
    %63 = vector.shape_cast %60 : vector<24x128xbf16> to vector<1x24x128xbf16>
    tpu.vector_store %arg4[%c0_54, %c0_55, %c0_56], %63 {strides = array<i32>} : memref<1x24x128xbf16, #tpu.memory_space<vmem>>, vector<1x24x128xbf16>,
    return
  }
  func.func @transform_0(%arg0: i32) -> (i32, i32, i32) {
    %c0_i32 = arith.constant 0 : i32
    %c0_i32_0 = arith.constant 0 : i32
    %c0_i32_1 = arith.constant 0 : i32
    return %arg0, %c0_i32, %c0_i32_0 : i32, i32, i32
  }
  func.func @transform_1(%arg0: i32) -> (i32, i32, i32) {
    %c0_i32 = arith.constant 0 : i32
    %c0_i32_0 = arith.constant 0 : i32
    %c0_i32_1 = arith.constant 0 : i32
    %c0_i32_2 = arith.constant 0 : i32
    return %c0_i32, %c0_i32_0, %c0_i32_1 : i32, i32, i32
  }
  func.func @transform_2(%arg0: i32) -> (i32, i32) {
    %c0_i32 = arith.constant 0 : i32
    %c0_i32_0 = arith.constant 0 : i32
    %c0_i32_1 = arith.constant 0 : i32
    return %c0_i32, %c0_i32_0 : i32, i32
  }
  func.func @transform_3(%arg0: i32) -> (i32, i32, i32) {
    %c0_i32 = arith.constant 0 : i32
    %c0_i32_0 = arith.constant 0 : i32
    %c0_i32_1 = arith.constant 0 : i32
    return %arg0, %c0_i32, %c0_i32_0 : i32, i32, i32
  }
}

module attributes {stable_mosaic.version = 11 : i64} {
  func.func @_conv9_kernel(%arg0: i32, %arg1: memref<1x108x16xbf16, #tpu.memory_space<vmem>>, %arg2: memref<9x16x128xbf16, #tpu.memory_space<vmem>>, %arg3: memref<1x128xf32, #tpu.memory_space<vmem>>, %arg4: memref<1x80x128xbf16, #tpu.memory_space<vmem>>) attributes {dimension_semantics = [#tpu.dimension_semantics<parallel>], iteration_bounds = array<i64: 2>, scalar_prefetch = 0 : i64, scratch_operands = 0 : i64, tpu.core_type = #tpu.core_type<tc>, window_params = [{transform_indices = @transform_0, window_bounds = array<i64: 1, 108, 16>}, {pipeline_mode = #tpu.pipeline_mode<synchronous>, transform_indices = @transform_1, window_bounds = array<i64: 9, 16, 128>}, {pipeline_mode = #tpu.pipeline_mode<synchronous>, transform_indices = @transform_2, window_bounds = array<i64: 1, 128>}, {transform_indices = @transform_3, window_bounds = array<i64: 1, 80, 128>}]} {
    %c0 = arith.constant 0 : index
    %c0_0 = arith.constant 0 : index
    %0 = vector.load %arg3[%c0, %c0_0] : memref<1x128xf32, #tpu.memory_space<vmem>>, vector<1x128xf32>
    %cst = arith.constant 0.000000e+00 : f32
    %1 = vector.broadcast %cst : f32 to vector<80x128xf32>
    %c0_1 = arith.constant 0 : index
    %c0_2 = arith.constant 0 : index
    %c0_3 = arith.constant 0 : index
    %2 = vector.load %arg1[%c0_1, %c0_2, %c0_3] : memref<1x108x16xbf16, #tpu.memory_space<vmem>>, vector<1x80x16xbf16>
    %3 = vector.shape_cast %2 : vector<1x80x16xbf16> to vector<80x16xbf16>
    %c0_4 = arith.constant 0 : index
    %c0_5 = arith.constant 0 : index
    %c0_6 = arith.constant 0 : index
    %4 = vector.load %arg2[%c0_4, %c0_5, %c0_6] : memref<9x16x128xbf16, #tpu.memory_space<vmem>>, vector<1x16x128xbf16>
    %5 = vector.shape_cast %4 : vector<1x16x128xbf16> to vector<16x128xbf16>
    %cst_7 = arith.constant dense<0.000000e+00> : vector<80x128xf32>
    %6 = tpu.matmul %3, %5, %cst_7 {dimension_numbers = #tpu.dot_dimension_numbers<[1], [0], [0], [1], [0, 0, 1, 1], [], []>} : vector<80x16xbf16>, vector<16x128xbf16>, vector<80x128xf32> -> vector<80x128xf32>
    %7 = arith.addf %1, %6 : vector<80x128xf32>
    %c0_8 = arith.constant 0 : index
    %c1 = arith.constant 1 : index
    %c0_9 = arith.constant 0 : index
    %8 = vector.load %arg1[%c0_8, %c1, %c0_9] : memref<1x108x16xbf16, #tpu.memory_space<vmem>>, vector<1x80x16xbf16>
    %9 = vector.shape_cast %8 : vector<1x80x16xbf16> to vector<80x16xbf16>
    %c1_10 = arith.constant 1 : index
    %c0_11 = arith.constant 0 : index
    %c0_12 = arith.constant 0 : index
    %10 = vector.load %arg2[%c1_10, %c0_11, %c0_12] : memref<9x16x128xbf16, #tpu.memory_space<vmem>>, vector<1x16x128xbf16>
    %11 = vector.shape_cast %10 : vector<1x16x128xbf16> to vector<16x128xbf16>
    %cst_13 = arith.constant dense<0.000000e+00> : vector<80x128xf32>
    %12 = tpu.matmul %9, %11, %cst_13 {dimension_numbers = #tpu.dot_dimension_numbers<[1], [0], [0], [1], [0, 0, 1, 1], [], []>} : vector<80x16xbf16>, vector<16x128xbf16>, vector<80x128xf32> -> vector<80x128xf32>
    %13 = arith.addf %7, %12 : vector<80x128xf32>
    %c0_14 = arith.constant 0 : index
    %c2 = arith.constant 2 : index
    %c0_15 = arith.constant 0 : index
    %14 = vector.load %arg1[%c0_14, %c2, %c0_15] : memref<1x108x16xbf16, #tpu.memory_space<vmem>>, vector<1x80x16xbf16>
    %15 = vector.shape_cast %14 : vector<1x80x16xbf16> to vector<80x16xbf16>
    %c2_16 = arith.constant 2 : index
    %c0_17 = arith.constant 0 : index
    %c0_18 = arith.constant 0 : index
    %16 = vector.load %arg2[%c2_16, %c0_17, %c0_18] : memref<9x16x128xbf16, #tpu.memory_space<vmem>>, vector<1x16x128xbf16>
    %17 = vector.shape_cast %16 : vector<1x16x128xbf16> to vector<16x128xbf16>
    %cst_19 = arith.constant dense<0.000000e+00> : vector<80x128xf32>
    %18 = tpu.matmul %15, %17, %cst_19 {dimension_numbers = #tpu.dot_dimension_numbers<[1], [0], [0], [1], [0, 0, 1, 1], [], []>} : vector<80x16xbf16>, vector<16x128xbf16>, vector<80x128xf32> -> vector<80x128xf32>
    %19 = arith.addf %13, %18 : vector<80x128xf32>
    %c0_20 = arith.constant 0 : index
    %c10 = arith.constant 10 : index
    %c0_21 = arith.constant 0 : index
    %20 = vector.load %arg1[%c0_20, %c10, %c0_21] : memref<1x108x16xbf16, #tpu.memory_space<vmem>>, vector<1x80x16xbf16>
    %21 = vector.shape_cast %20 : vector<1x80x16xbf16> to vector<80x16xbf16>
    %c3 = arith.constant 3 : index
    %c0_22 = arith.constant 0 : index
    %c0_23 = arith.constant 0 : index
    %22 = vector.load %arg2[%c3, %c0_22, %c0_23] : memref<9x16x128xbf16, #tpu.memory_space<vmem>>, vector<1x16x128xbf16>
    %23 = vector.shape_cast %22 : vector<1x16x128xbf16> to vector<16x128xbf16>
    %cst_24 = arith.constant dense<0.000000e+00> : vector<80x128xf32>
    %24 = tpu.matmul %21, %23, %cst_24 {dimension_numbers = #tpu.dot_dimension_numbers<[1], [0], [0], [1], [0, 0, 1, 1], [], []>} : vector<80x16xbf16>, vector<16x128xbf16>, vector<80x128xf32> -> vector<80x128xf32>
    %25 = arith.addf %19, %24 : vector<80x128xf32>
    %c0_25 = arith.constant 0 : index
    %c11 = arith.constant 11 : index
    %c0_26 = arith.constant 0 : index
    %26 = vector.load %arg1[%c0_25, %c11, %c0_26] : memref<1x108x16xbf16, #tpu.memory_space<vmem>>, vector<1x80x16xbf16>
    %27 = vector.shape_cast %26 : vector<1x80x16xbf16> to vector<80x16xbf16>
    %c4 = arith.constant 4 : index
    %c0_27 = arith.constant 0 : index
    %c0_28 = arith.constant 0 : index
    %28 = vector.load %arg2[%c4, %c0_27, %c0_28] : memref<9x16x128xbf16, #tpu.memory_space<vmem>>, vector<1x16x128xbf16>
    %29 = vector.shape_cast %28 : vector<1x16x128xbf16> to vector<16x128xbf16>
    %cst_29 = arith.constant dense<0.000000e+00> : vector<80x128xf32>
    %30 = tpu.matmul %27, %29, %cst_29 {dimension_numbers = #tpu.dot_dimension_numbers<[1], [0], [0], [1], [0, 0, 1, 1], [], []>} : vector<80x16xbf16>, vector<16x128xbf16>, vector<80x128xf32> -> vector<80x128xf32>
    %31 = arith.addf %25, %30 : vector<80x128xf32>
    %c0_30 = arith.constant 0 : index
    %c12 = arith.constant 12 : index
    %c0_31 = arith.constant 0 : index
    %32 = vector.load %arg1[%c0_30, %c12, %c0_31] : memref<1x108x16xbf16, #tpu.memory_space<vmem>>, vector<1x80x16xbf16>
    %33 = vector.shape_cast %32 : vector<1x80x16xbf16> to vector<80x16xbf16>
    %c5 = arith.constant 5 : index
    %c0_32 = arith.constant 0 : index
    %c0_33 = arith.constant 0 : index
    %34 = vector.load %arg2[%c5, %c0_32, %c0_33] : memref<9x16x128xbf16, #tpu.memory_space<vmem>>, vector<1x16x128xbf16>
    %35 = vector.shape_cast %34 : vector<1x16x128xbf16> to vector<16x128xbf16>
    %cst_34 = arith.constant dense<0.000000e+00> : vector<80x128xf32>
    %36 = tpu.matmul %33, %35, %cst_34 {dimension_numbers = #tpu.dot_dimension_numbers<[1], [0], [0], [1], [0, 0, 1, 1], [], []>} : vector<80x16xbf16>, vector<16x128xbf16>, vector<80x128xf32> -> vector<80x128xf32>
    %37 = arith.addf %31, %36 : vector<80x128xf32>
    %c0_35 = arith.constant 0 : index
    %c20 = arith.constant 20 : index
    %c0_36 = arith.constant 0 : index
    %38 = vector.load %arg1[%c0_35, %c20, %c0_36] : memref<1x108x16xbf16, #tpu.memory_space<vmem>>, vector<1x80x16xbf16>
    %39 = vector.shape_cast %38 : vector<1x80x16xbf16> to vector<80x16xbf16>
    %c6 = arith.constant 6 : index
    %c0_37 = arith.constant 0 : index
    %c0_38 = arith.constant 0 : index
    %40 = vector.load %arg2[%c6, %c0_37, %c0_38] : memref<9x16x128xbf16, #tpu.memory_space<vmem>>, vector<1x16x128xbf16>
    %41 = vector.shape_cast %40 : vector<1x16x128xbf16> to vector<16x128xbf16>
    %cst_39 = arith.constant dense<0.000000e+00> : vector<80x128xf32>
    %42 = tpu.matmul %39, %41, %cst_39 {dimension_numbers = #tpu.dot_dimension_numbers<[1], [0], [0], [1], [0, 0, 1, 1], [], []>} : vector<80x16xbf16>, vector<16x128xbf16>, vector<80x128xf32> -> vector<80x128xf32>
    %43 = arith.addf %37, %42 : vector<80x128xf32>
    %c0_40 = arith.constant 0 : index
    %c21 = arith.constant 21 : index
    %c0_41 = arith.constant 0 : index
    %44 = vector.load %arg1[%c0_40, %c21, %c0_41] : memref<1x108x16xbf16, #tpu.memory_space<vmem>>, vector<1x80x16xbf16>
    %45 = vector.shape_cast %44 : vector<1x80x16xbf16> to vector<80x16xbf16>
    %c7 = arith.constant 7 : index
    %c0_42 = arith.constant 0 : index
    %c0_43 = arith.constant 0 : index
    %46 = vector.load %arg2[%c7, %c0_42, %c0_43] : memref<9x16x128xbf16, #tpu.memory_space<vmem>>, vector<1x16x128xbf16>
    %47 = vector.shape_cast %46 : vector<1x16x128xbf16> to vector<16x128xbf16>
    %cst_44 = arith.constant dense<0.000000e+00> : vector<80x128xf32>
    %48 = tpu.matmul %45, %47, %cst_44 {dimension_numbers = #tpu.dot_dimension_numbers<[1], [0], [0], [1], [0, 0, 1, 1], [], []>} : vector<80x16xbf16>, vector<16x128xbf16>, vector<80x128xf32> -> vector<80x128xf32>
    %49 = arith.addf %43, %48 : vector<80x128xf32>
    %c0_45 = arith.constant 0 : index
    %c22 = arith.constant 22 : index
    %c0_46 = arith.constant 0 : index
    %50 = vector.load %arg1[%c0_45, %c22, %c0_46] : memref<1x108x16xbf16, #tpu.memory_space<vmem>>, vector<1x80x16xbf16>
    %51 = vector.shape_cast %50 : vector<1x80x16xbf16> to vector<80x16xbf16>
    %c8 = arith.constant 8 : index
    %c0_47 = arith.constant 0 : index
    %c0_48 = arith.constant 0 : index
    %52 = vector.load %arg2[%c8, %c0_47, %c0_48] : memref<9x16x128xbf16, #tpu.memory_space<vmem>>, vector<1x16x128xbf16>
    %53 = vector.shape_cast %52 : vector<1x16x128xbf16> to vector<16x128xbf16>
    %cst_49 = arith.constant dense<0.000000e+00> : vector<80x128xf32>
    %54 = tpu.matmul %51, %53, %cst_49 {dimension_numbers = #tpu.dot_dimension_numbers<[1], [0], [0], [1], [0, 0, 1, 1], [], []>} : vector<80x16xbf16>, vector<16x128xbf16>, vector<80x128xf32> -> vector<80x128xf32>
    %55 = arith.addf %49, %54 : vector<80x128xf32>
    %56 = vector.broadcast %0 : vector<1x128xf32> to vector<80x128xf32>
    %57 = arith.addf %55, %56 : vector<80x128xf32>
    %58 = arith.negf %57 : vector<80x128xf32>
    %59 = math.exp %58 : vector<80x128xf32>
    %cst_50 = arith.constant 1.000000e+00 : f32
    %60 = vector.broadcast %cst_50 : f32 to vector<80x128xf32>
    %61 = arith.addf %60, %59 : vector<80x128xf32>
    %62 = arith.divf %60, %61 : vector<80x128xf32>
    %63 = arith.truncf %62 : vector<80x128xf32> to vector<80x128xbf16>
    %c0_51 = arith.constant 0 : index
    %c0_52 = arith.constant 0 : index
    %c0_53 = arith.constant 0 : index
    %64 = vector.load %arg4[%c0_51, %c0_52, %c0_53] : memref<1x80x128xbf16, #tpu.memory_space<vmem>>, vector<1x80x128xbf16>
    %65 = vector.shape_cast %64 : vector<1x80x128xbf16> to vector<80x128xbf16>
    %66 = vector.shape_cast %63 : vector<80x128xbf16> to vector<1x80x128xbf16>
    tpu.vector_store %arg4[%c0_51, %c0_52, %c0_53], %66 {strides = array<i32>} : memref<1x80x128xbf16, #tpu.memory_space<vmem>>, vector<1x80x128xbf16>,
    return
  }
  func.func @transform_0(%arg0: i32) -> (i32, i32, i32) {
    %c0_i32 = arith.constant 0 : i32
    %c0_i32_0 = arith.constant 0 : i32
    %c0_i32_1 = arith.constant 0 : i32
    return %arg0, %c0_i32, %c0_i32_0 : i32, i32, i32
  }
  func.func @transform_1(%arg0: i32) -> (i32, i32, i32) {
    %c0_i32 = arith.constant 0 : i32
    %c0_i32_0 = arith.constant 0 : i32
    %c0_i32_1 = arith.constant 0 : i32
    %c0_i32_2 = arith.constant 0 : i32
    return %c0_i32, %c0_i32_0, %c0_i32_1 : i32, i32, i32
  }
  func.func @transform_2(%arg0: i32) -> (i32, i32) {
    %c0_i32 = arith.constant 0 : i32
    %c0_i32_0 = arith.constant 0 : i32
    %c0_i32_1 = arith.constant 0 : i32
    return %c0_i32, %c0_i32_0 : i32, i32
  }
  func.func @transform_3(%arg0: i32) -> (i32, i32, i32) {
    %c0_i32 = arith.constant 0 : i32
    %c0_i32_0 = arith.constant 0 : i32
    %c0_i32_1 = arith.constant 0 : i32
    return %arg0, %c0_i32, %c0_i32_0 : i32, i32, i32
  }
}

</mosaic_0001>

<llo_original>
// kernel: decoder_forward.3
$region0: #{decoder_forward.3}
  #allocation0 [shape = 'u32[]', space=smem, size = 0x4, offset = 0x4, fixed_abs, tag = 'smem constant byte address 0x4 - core index']
  #allocation1 [shape = 'u32[144,128]{1,0:T(1,128)}', space=vmem, size = 0x12000, scoped, tag = 'internal scratch']
  %s0 = inlined_call_operand.vmem [shape: bf16[2,8], index: 0, kind: input, shape index: {}]
  %s1 = inlined_call_operand.vmem [shape: bf16[8,512], index: 1, kind: input, shape index: {}]
  %s2 = inlined_call_operand.vmem [shape: f32[1,512], index: 2, kind: input, shape index: {}]
  %s3 = inlined_call_operand.vmem [shape: bf16[2,512], index: 3, kind: output, shape index: {}]
  %s4 = sld [smem:[#allocation0]]
  $region22: #{decoder_forward.3} parent=0
    _
  %s6 = ssub.s32 1, %s4
  %s7 = scalar_select 0, %s6, %s4
  // Predicated region
  $region2: #{decoder_forward.3} parent=0 // pred_check
    _
  $region3: #{decoder_forward.3} parent=0 // pred_check_branch
    %9 = sbr.rel (0) target = $region5
  $region4: #{decoder_forward.3} parent=0 // pred_region
    _
  $region5: #{decoder_forward.3} parent=0 // pred_fallthru
    _
  // Predicated region
  $region6: #{decoder_forward.3} parent=0 // pred_check
    _
  $region7: #{decoder_forward.3} parent=0 // pred_check_branch
    %11 = sbr.rel (0) target = $region9
  $region8: #{decoder_forward.3} parent=0 // pred_region
    _
  $region9: #{decoder_forward.3} parent=0 // pred_fallthru
    _
  // Predicated region
  $region10: #{decoder_forward.3} parent=0 // pred_check
    _
  $region11: #{decoder_forward.3} parent=0 // pred_check_branch
    %13 = sbr.rel (0) target = $region13
  $region12: #{decoder_forward.3} parent=0 // pred_region
    _
  $region13: #{decoder_forward.3} parent=0 // pred_fallthru
    _
  %v15 = vld [vmem:[%s0] sm:$0x1]
  %v16 = vld [vmem:[%s1] sm:$0xff]
  %v17 = vld [vmem:[%s1 + $0x8] sm:$0xff]
  %v18 = vld [vmem:[%s2] sm:$0xf]
  %v20 = vlaneseq
  %v21 = vshrl.u32 %v20, 7
  %v22 = vsub.s32 0, %v21
  %v23 = vrot.slane %v18, %v22
  %v24 = vlaneseq
  %v25 = vshrl.u32 %v24, 7
  %v26 = vsub.s32 1, %v25
  %v27 = vrot.slane %v18, %v26
  %v28 = vlaneseq
  %v29 = vshrl.u32 %v28, 7
  %v30 = vsub.s32 2, %v29
  %v31 = vrot.slane %v18, %v30
  %v32 = vlaneseq
  %v33 = vshrl.u32 %v32, 7
  %v34 = vsub.s32 3, %v33
  %v35 = vrot.slane %v18, %v34
  %v42 = vunpack.c.l.b16 %v16
  %v43 = vunpack.c.h.b16 %v16
  %v44 = vunpack.c.l.b16 %v17
  %v45 = vunpack.c.h.b16 %v17
  %v46 = vpack.c.b16 %v42, %v42
  %v47 = vpack.c.b16 %v43, %v43
  %v48 = vpack.c.b16 %v44, %v44
  %v49 = vpack.c.b16 %v45, %v45
  %vm50 = vcmask 64512
  %v52 = vsel %vm50, %v15, 0
  %vm54 = vcmask 1043456
  %v56 = vsel %vm54, %v46, 0
  %v59 = vsel %vm54, %v47, 0
  %v62 = vsel %vm54, %v48, 0
  %v65 = vsel %vm54, %v49, 0
  %67 = vmatprep.subr.bf16.mxu0 %v59
  %68 = vmatpush1.bf16.msra.mxu0 %v56
  %69 = vmatprep.subr.bf16.mxu0 0
  %70 = vmatpush1.bf16.msra.mxu0 0
  %71 = vmatprep.subr.bf16.mxu0 0
  %72 = vmatpush1.bf16.msra.mxu0 0
  %73 = vmatprep.subr.bf16.mxu0 0
  %74 = vmatpush1.bf16.msra.mxu0 0
  %75 = vmatprep.subr.bf16.mxu0 0
  %76 = vmatpush1.bf16.msra.mxu0 0
  %77 = vmatprep.subr.bf16.mxu0 0
  %78 = vmatpush1.bf16.msra.mxu0 0
  %79 = vmatprep.subr.bf16.mxu0 0
  %80 = vmatpush1.bf16.msra.mxu0 0
  %81 = vmatprep.subr.bf16.mxu0 0
  %82 = vmatpush1.bf16.msra.mxu0 0
  %83 = vmatprep.subr.bf16.mxu0 0
  %84 = vmatpush1.bf16.msra.mxu0 0
  %85 = vmatprep.subr.bf16.mxu0 0
  %86 = vmatpush1.bf16.msra.mxu0 0
  %87 = vmatprep.subr.bf16.mxu0 0
  %88 = vmatpush1.bf16.msra.mxu0 0
  %89 = vmatprep.subr.bf16.mxu0 0
  %90 = vmatpush1.bf16.msra.mxu0 0
  %91 = vmatprep.subr.bf16.mxu0 0
  %92 = vmatpush1.bf16.msra.mxu0 0
  %93 = vmatprep.subr.bf16.mxu0 0
  %94 = vmatpush1.bf16.msra.mxu0 0
  %95 = vmatprep.subr.bf16.mxu0 0
  %96 = vmatpush1.bf16.msra.mxu0 0
  %97 = vmatprep.subr.bf16.mxu0 0
  %98 = vmatpush1.bf16.msra.mxu0 0
  %99 = vmatprep.mubr.bf16.mxu0 0
  %100 = vmatmul.mubr.bf16.gmra.mrb[0].mxu0 %v52
  %v101 = vpop.f32.mrb[0].mxu0
  %v102 = vadd.f32 %v23, %v101
  %v103 = vpop.f32.mrb[0].mxu0
  %v104 = vadd.f32 %v27, %v103
  %v105 = vpop.f32.mrb[0].mxu0
  %v106 = vpop.f32.mrb[0].mxu0
  %107 = vdwg.mxu0
  %108 = vmatprep.subr.bf16.mxu0 %v65
  %109 = vmatpush1.bf16.msra.mxu0 %v62
  %110 = vmatprep.subr.bf16.mxu0 0
  %111 = vmatpush1.bf16.msra.mxu0 0
  %112 = vmatprep.subr.bf16.mxu0 0
  %113 = vmatpush1.bf16.msra.mxu0 0
  %114 = vmatprep.subr.bf16.mxu0 0
  %115 = vmatpush1.bf16.msra.mxu0 0
  %116 = vmatprep.subr.bf16.mxu0 0
  %117 = vmatpush1.bf16.msra.mxu0 0
  %118 = vmatprep.subr.bf16.mxu0 0
  %119 = vmatpush1.bf16.msra.mxu0 0
  %120 = vmatprep.subr.bf16.mxu0 0
  %121 = vmatpush1.bf16.msra.mxu0 0
  %122 = vmatprep.subr.bf16.mxu0 0
  %123 = vmatpush1.bf16.msra.mxu0 0
  %124 = vmatprep.subr.bf16.mxu0 0
  %125 = vmatpush1.bf16.msra.mxu0 0
  %126 = vmatprep.subr.bf16.mxu0 0
  %127 = vmatpush1.bf16.msra.mxu0 0
  %128 = vmatprep.subr.bf16.mxu0 0
  %129 = vmatpush1.bf16.msra.mxu0 0
  %130 = vmatprep.subr.bf16.mxu0 0
  %131 = vmatpush1.bf16.msra.mxu0 0
  %132 = vmatprep.subr.bf16.mxu0 0
  %133 = vmatpush1.bf16.msra.mxu0 0
  %134 = vmatprep.subr.bf16.mxu0 0
  %135 = vmatpush1.bf16.msra.mxu0 0
  %136 = vmatprep.subr.bf16.mxu0 0
  %137 = vmatpush1.bf16.msra.mxu0 0
  %138 = vmatprep.subr.bf16.mxu0 0
  %139 = vmatpush1.bf16.msra.mxu0 0
  %140 = vmatprep.mubr.bf16.mxu0 0
  %141 = vmatmul.mubr.bf16.gmra.mrb[0].mxu0 %v52
  %v142 = vpop.f32.mrb[0].mxu0
  %v143 = vadd.f32 %v31, %v142
  %v144 = vpop.f32.mrb[0].mxu0
  %v145 = vadd.f32 %v35, %v144
  %v146 = vpop.f32.mrb[0].mxu0
  %v147 = vpop.f32.mrb[0].mxu0
  %148 = vdwg.mxu0
  %v149 = vmax.f32 %v102, 0.0
  %v150 = vmax.f32 %v104, 0.0
  %v151 = vmax.f32 %v143, 0.0
  %v152 = vmax.f32 %v145, 0.0
  %v153 = vpack.c.bf16 %v149, %v149
  %v154 = vpack.c.bf16 %v150, %v150
  %v155 = vpack.c.bf16 %v151, %v151
  %v156 = vpack.c.bf16 %v152, %v152
  %v161 = vcombine.low %v153, %v154
  %v162 = vcombine.low %v155, %v156
  %v164 = vunpack.c.l.s4 1966171168
  %v165 = vunpack.c.0.s8 %v164
  %v166 = vlaneseq
  %v167 = vshrl.u32 %v166, 7
  %v168 = vsub.s32 %v165, %v167
  %v169 = vrot.slane %v161, %v168
  %v171 = vunpack.c.l.s4 1966171168
  %v172 = vunpack.c.0.s8 %v171
  %v173 = vlaneseq
  %v174 = vshrl.u32 %v173, 7
  %v175 = vsub.s32 %v172, %v174
  %v176 = vrot.slane %v162, %v175
  %v177 = vcombine.low %v169, %v176
  %v179 = vunpack.c.l.s4 1966171168
  %v180 = vunpack.c.0.s8 %v179
  %v181 = vlaneseq
  %v182 = vshrl.u32 %v181, 7
  %v183 = vsub.s32 %v180, %v182
  %v184 = vrot.slane %v177, %v183
  %186 = vst [vmem:[%s3] sm:$0xf] %v184
  // Predicated region
  $region14: #{decoder_forward.3} parent=0 // pred_check
    _
  $region15: #{decoder_forward.3} parent=0 // pred_check_branch
    %188 = sbr.rel (0) target = $region17
  $region16: #{decoder_forward.3} parent=0 // pred_region
    _
  $region17: #{decoder_forward.3} parent=0 // pred_fallthru
    _
  // Predicated region
  $region18: #{decoder_forward.3} parent=0 // pred_check
    _
  $region19: #{decoder_forward.3} parent=0 // pred_check_branch
    %190 = sbr.rel (0) target = $region21
  $region20: #{decoder_forward.3} parent=0 // pred_region
    _
  $region21: #{decoder_forward.3} parent=0 // pred_fallthru
    _

// kernel: decoder_forward.4
$region0: #{decoder_forward.4}
  #allocation0 [shape = 'u32[]', space=smem, size = 0x4, offset = 0x4, fixed_abs, tag = 'smem constant byte address 0x4 - core index']
  #allocation1 [shape = 'u32[144,128]{1,0:T(1,128)}', space=vmem, size = 0x12000, scoped, tag = 'internal scratch']
  %s0 = inlined_call_operand.vmem [shape: bf16[2,44,32], index: 0, kind: input, shape index: {}]
  %s1 = inlined_call_operand.vmem [shape: bf16[9,32,128], index: 1, kind: input, shape index: {}]
  %s2 = inlined_call_operand.vmem [shape: f32[1,128], index: 2, kind: input, shape index: {}]
  %s3 = inlined_call_operand.vmem [shape: bf16[2,24,128], index: 3, kind: output, shape index: {}]
  %s4 = sld [smem:[#allocation0]]
  $region45: #{decoder_forward.4} parent=0
    _
  %s6 = ssub.s32 1, %s4
  %s7 = scalar_select 0, %s6, %s4
  loop: start=0, step=1, limit=4
  $region2: #{decoder_forward.4} parent=0 // loop_pre_header
    _
  $region3: #{decoder_forward.4} parent=0 // loop_header
    %s9 = sphi 0, %s13
    %p10 = scmp.ge.s32.totalorder %s9, 4
    %s19 = sphi 0, %s21
    %s22 = sphi 0, %s19
    %s23 = sphi 0, %s22
    %s39 = sphi 0, %s23
    %s43 = sphi 0, %s43
    %s45 = sphi 0, %s43
    %s46 = sphi 0, %s45
    %s60 = sphi 0, %s46
    %s64 = sphi 0, %s64
    %s66 = sphi 0, %s64
    %s67 = sphi 0, %s66
    %s81 = sphi 0, %s67
    %s87 = sphi 0, %s89
    %s90 = sphi 0, %s87
    %s91 = sphi 0, %s90
    %s107 = sphi 0, %s91
  $region4: #{decoder_forward.4} parent=0 // loop_header_branch
    %12 = sbr.rel (%p10) target = $region8
  $region5: #{decoder_forward.4} parent=0 // loop_body
    %s14 = ssub.s32 %s9, 1
    %s15 = ssub.s32 %s9, 2
    %s16 = sadd.s32 %s9, 1
    %s17 = ssub.s32 %s9, %s16
    %p18 = scmp.eq.s32.totalorder %s17, 0
    %s20 = sadd.s32 %s19, 1
    %s21 = scalar_select %p18, %s19, %s20
    %p24 = pneg %p18
    %p25 = scmp.eq.s32.totalorder %s9, 1
    %p26 = por %p24, %p25
    %p27 = scmp.ne.s32.totalorder %s19, %s22
    %p28 = scmp.eq.s32.totalorder %s9, 0
    %p29 = por %p27, %p28
    %p30 = scmp.ne.s32.totalorder %s19, %s22
    %p31 = scmp.eq.s32.totalorder %s14, 1
    %p32 = por %p30, %p31
    %p33 = scmp.ne.s32.totalorder %s22, %s23
    %p34 = scmp.eq.s32.totalorder %s14, 0
    %p35 = por %p33, %p34
    %p36 = scmp.ne.s32.totalorder %s22, %s23
    %p37 = scmp.eq.s32.totalorder %s15, 1
    %p38 = por %p36, %p37
    %p40 = scmp.ne.s32.totalorder %s23, %s39
    %p41 = scmp.eq.s32.totalorder %s15, 0
    %p42 = por %p40, %p41
    %s44 = sadd.s32 %s43, 1
    %p47 = scmp.eq.s32.totalorder %s9, 1
    %p48 = scmp.ne.s32.totalorder %s43, %s45
    %p49 = scmp.eq.s32.totalorder %s9, 0
    %p50 = por %p48, %p49
    %p51 = scmp.ne.s32.totalorder %s43, %s45
    %p52 = scmp.eq.s32.totalorder %s14, 1
    %p53 = por %p51, %p52
    %p54 = scmp.ne.s32.totalorder %s45, %s46
    %p55 = scmp.eq.s32.totalorder %s14, 0
    %p56 = por %p54, %p55
    %p57 = scmp.ne.s32.totalorder %s45, %s46
    %p58 = scmp.eq.s32.totalorder %s15, 1
    %p59 = por %p57, %p58
    %p61 = scmp.ne.s32.totalorder %s46, %s60
    %p62 = scmp.eq.s32.totalorder %s15, 0
    %p63 = por %p61, %p62
    %s65 = sadd.s32 %s64, 1
    %p68 = scmp.eq.s32.totalorder %s9, 1
    %p69 = scmp.ne.s32.totalorder %s64, %s66
    %p70 = scmp.eq.s32.totalorder %s9, 0
    %p71 = por %p69, %p70
    %p72 = scmp.ne.s32.totalorder %s64, %s66
    %p73 = scmp.eq.s32.totalorder %s14, 1
    %p74 = por %p72, %p73
    %p75 = scmp.ne.s32.totalorder %s66, %s67
    %p76 = scmp.eq.s32.totalorder %s14, 0
    %p77 = por %p75, %p76
    %p78 = scmp.ne.s32.totalorder %s66, %s67
    %p79 = scmp.eq.s32.totalorder %s15, 1
    %p80 = por %p78, %p79
    %p82 = scmp.ne.s32.totalorder %s67, %s81
    %p83 = scmp.eq.s32.totalorder %s15, 0
    %p84 = por %p82, %p83
    %s85 = ssub.s32 %s9, %s16
    %p86 = scmp.eq.s32.totalorder %s85, 0
    %s88 = sadd.s32 %s87, 1
    %s89 = scalar_select %p86, %s87, %s88
    %p92 = pneg %p86
    %p93 = scmp.eq.s32.totalorder %s9, 1
    %p94 = por %p92, %p93
    %p95 = scmp.ne.s32.totalorder %s87, %s90
    %p96 = scmp.eq.s32.totalorder %s9, 0
    %p97 = por %p95, %p96
    %p98 = scmp.ne.s32.totalorder %s87, %s90
    %p99 = scmp.eq.s32.totalorder %s14, 1
    %p100 = por %p98, %p99
    %p101 = scmp.ne.s32.totalorder %s90, %s91
    %p102 = scmp.eq.s32.totalorder %s14, 0
    %p103 = por %p101, %p102
    %p104 = scmp.ne.s32.totalorder %s90, %s91
    %p105 = scmp.eq.s32.totalorder %s15, 1
    %p106 = por %p104, %p105
    %p108 = scmp.ne.s32.totalorder %s91, %s107
    %p109 = scmp.eq.s32.totalorder %s15, 0
    %p110 = por %p108, %p109
    %p111 = scmp.le.s32.totalorder 1, %s9
    %p112 = scmp.lt.s32.totalorder %s9, 3
    %p113 = pnand %p111, %p112
    %p114 = pneg %p113
    // Predicated region
    $region9: #{decoder_forward.4} parent=5 // pred_check
      _
    $region10: #{decoder_forward.4} parent=5 // pred_check_branch
      %116 = sbr.rel (%p113) target = $region12
    $region11: #{decoder_forward.4} parent=5 // pred_region
      %s117 = ssub.s32 %s9, 1
      // Predicated region
      $region13: #{decoder_forward.4} parent=11 // pred_check
        %p118 = pneg %p56
      $region14: #{decoder_forward.4} parent=11 // pred_check_branch
        %120 = sbr.rel (%p118) target = $region16
      $region15: #{decoder_forward.4} parent=11 // pred_region
        _
      $region16: #{decoder_forward.4} parent=11 // pred_fallthru
        _
      // Predicated region
      $region17: #{decoder_forward.4} parent=11 // pred_check
        %p121 = pneg %p77
      $region18: #{decoder_forward.4} parent=11 // pred_check_branch
        %123 = sbr.rel (%p121) target = $region20
      $region19: #{decoder_forward.4} parent=11 // pred_region
        _
      $region20: #{decoder_forward.4} parent=11 // pred_fallthru
        _
    $region12: #{decoder_forward.4} parent=5 // pred_fallthru
      _
    %p124 = scmp.lt.s32.totalorder %s9, 2
    // Predicated region
    $region21: #{decoder_forward.4} parent=5 // pred_check
      %p125 = pneg %p124
    $region22: #{decoder_forward.4} parent=5 // pred_check_branch
      %127 = sbr.rel (%p125) target = $region24
    $region23: #{decoder_forward.4} parent=5 // pred_region
      // Predicated region
      $region25: #{decoder_forward.4} parent=23 // pred_check
        %p128 = pneg %p29
      $region26: #{decoder_forward.4} parent=23 // pred_check_branch
        %130 = sbr.rel (%p128) target = $region28
      $region27: #{decoder_forward.4} parent=23 // pred_region
        %p131 = scmp.lt.s32.totalorder %s9, 1
        %s132 = scalar_select %p131, %s9, 1
        %s133 = smul.addr %s132, 6
        %s134 = smul.addr %s133, 4
        %s135 = scalar_lea.vmem %s0, %s134
      $region28: #{decoder_forward.4} parent=23 // pred_fallthru
        _
    $region24: #{decoder_forward.4} parent=5 // pred_fallthru
      _
    %p136 = scmp.le.s32.totalorder 1, %s9
    %p137 = scmp.lt.s32.totalorder %s9, 3
    %p138 = pnand %p136, %p137
    %p139 = pneg %p138
    // Predicated region
    $region29: #{decoder_forward.4} parent=5 // pred_check
      _
    $region30: #{decoder_forward.4} parent=5 // pred_check_branch
      %141 = sbr.rel (%p138) target = $region32
    $region31: #{decoder_forward.4} parent=5 // pred_region
      %s142 = ssub.s32 %s9, 1
      %p143 = scmp.lt.s32.totalorder %s14, 1
      %s144 = scalar_select %p143, %s14, 1
      %s145 = smul.addr %s144, 6
      %s146 = smul.addr %s145, 4
      %s147 = scalar_lea.vmem %s0, %s146
      %p148 = pneg %p35
      %p149 = pneg %p32
      %p150 = pneg %p56
      %p151 = pneg %p53
      %p152 = pneg %p77
      %p153 = pneg %p74
      %p154 = pneg %p103
      %p155 = pneg %p100
      %p156 = scmp.lt.s32.totalorder %s14, 1
      %s157 = scalar_select %p156, %s14, 1
      %s158 = smul.addr %s157, 3
      %s159 = smul.addr %s158, 4
      %s160 = scalar_lea.vmem %s3, %s159
      %p161 = scmp.lt.s32.totalorder %s14, 1
      %s162 = scalar_select %p161, %s14, 1
      %s163 = smul.addr %s162, 6
      %s164 = smul.addr %s163, 4
      %s165 = scalar_lea.vmem %s0, %s164
      %p166 = scmp.lt.s32.totalorder %s14, 1
      %s167 = scalar_select %p166, %s14, 1
      %s168 = smul.addr %s167, 3
      %s169 = smul.addr %s168, 4
      %s170 = scalar_lea.vmem %s3, %s169
      %v172 = vld [vmem:[%s2] sm:$0x1]
      %v173 = vld [vmem:[%s165] sm:$0xf]
      %v174 = vld [vmem:[%s165 + $0x4] sm:$0xf]
      %v175 = vld [vmem:[%s165 + $0x8] sm:$0xf]
      %v176 = vld [vmem:[%s1] sm:$0xf]
      %v177 = vld [vmem:[%s1 + $0x4] sm:$0xf]
      %v178 = vld [vmem:[%s1 + $0x8] sm:$0xf]
      %v179 = vld [vmem:[%s1 + $0xc] sm:$0xf]
      %v180 = vld [vmem:[%s165 + $0xc] sm:$0x1]
      %s181 = scalar_lea.vmem %s1, 16
      %v182 = vld [vmem:[%s181] sm:$0xf]
      %v183 = vld [vmem:[%s181 + $0x4] sm:$0xf]
      %v184 = vld [vmem:[%s181 + $0x8] sm:$0xf]
      %v185 = vld [vmem:[%s181 + $0xc] sm:$0xf]
      %v190 = vunpack.c.l.b16 %v173
      %v191 = vunpack.c.l.b16 %v174
      %v192 = vunpack.c.l.b16 %v175
      %v193 = vunpack.c.l.b16 %v180
      %v194 = vpack.c.b16 %v191, %v190
      %v195 = vpack.c.b16 %v193, %v192
      %vm196 = vsmask.f32 7424
      %v198 = vshrl.u32 %v194, 16
      %v200 = vshll.u32 %v194, 16
      %v202 = vrot.slane %v200, 1
      %v203 = vor.u32 %v198, %v202
      %v205 = vshll.u32 %v195, 16
      %v207 = vrot.slane %v205, 1
      %v208 = vsel %vm196, %v203, %v207
      %v209 = vshrl.u32 %v195, 16
      %v211 = vor.u32 %v209, %v207
      %v216 = vunpack.c.l.b16 %v182
      %v217 = vunpack.c.l.b16 %v183
      %v218 = vunpack.c.l.b16 %v184
      %v219 = vunpack.c.l.b16 %v185
      %v220 = vpack.c.b16 %v217, %v216
      %v221 = vpack.c.b16 %v219, %v218
      %vm224 = vcmask 261120
      %v226 = vsel %vm224, %v208, 0
      %v229 = vsel %vm224, %v211, 0
      %231 = vmatprep.subr.bf16.mxu0 0
      %232 = vmatpush1.bf16.msra.mxu0 %v220
      %233 = vmatprep.subr.bf16.mxu0 0
      %234 = vmatpush1.bf16.msra.mxu0 %v221
      %235 = vmatprep.subr.bf16.mxu0 0
      %236 = vmatpush1.bf16.msra.mxu0 0
      %237 = vmatprep.subr.bf16.mxu0 0
      %238 = vmatpush1.bf16.msra.mxu0 0
      %239 = vmatprep.subr.bf16.mxu0 0
      %240 = vmatpush1.bf16.msra.mxu0 0
      %241 = vmatprep.subr.bf16.mxu0 0
      %242 = vmatpush1.bf16.msra.mxu0 0
      %243 = vmatprep.subr.bf16.mxu0 0
      %244 = vmatpush1.bf16.msra.mxu0 0
      %245 = vmatprep.subr.bf16.mxu0 0
      %246 = vmatpush1.bf16.msra.mxu0 0
      %247 = vmatprep.subr.bf16.mxu0 0
      %248 = vmatpush1.bf16.msra.mxu0 0
      %249 = vmatprep.subr.bf16.mxu0 0
      %250 = vmatpush1.bf16.msra.mxu0 0
      %251 = vmatprep.subr.bf16.mxu0 0
      %252 = vmatpush1.bf16.msra.mxu0 0
      %253 = vmatprep.subr.bf16.mxu0 0
      %254 = vmatpush1.bf16.msra.mxu0 0
      %255 = vmatprep.subr.bf16.mxu0 0
      %256 = vmatpush1.bf16.msra.mxu0 0
      %257 = vmatprep.subr.bf16.mxu0 0
      %258 = vmatpush1.bf16.msra.mxu0 0
      %259 = vmatprep.subr.bf16.mxu0 0
      %260 = vmatpush1.bf16.msra.mxu0 0
      %261 = vmatprep.subr.bf16.mxu0 0
      %262 = vmatpush1.bf16.msra.mxu0 0
      %263 = vmatprep.mubr.bf16.mxu0 0
      %264 = vmatmul.mubr.bf16.gmra.mrb[0].mxu0 %v226
      %v265 = vpop.f32.mrb[0].mxu0
      %v266 = vadd.f32 0.0, %v265
      %v267 = vpop.f32.mrb[0].mxu0
      %v268 = vpop.f32.mrb[0].mxu0
      %v269 = vadd.f32 0.0, %v268
      %v270 = vpop.f32.mrb[0].mxu0
      %271 = vmatprep.mubr.bf16.mxu0 0
      %272 = vmatmul.mubr.bf16.gmra.mrb[0].mxu0 %v229
      %v273 = vpop.f32.mrb[0].mxu0
      %v274 = vadd.f32 0.0, %v273
      %v275 = vpop.f32.mrb[0].mxu0
      %v276 = vpop.f32.mrb[0].mxu0
      %v277 = vpop.f32.mrb[0].mxu0
      %278 = vdwg.mxu0
      %v279 = vpack.c.b16 %v192, %v192
      %v284 = vunpack.c.l.b16 %v176
      %v285 = vunpack.c.l.b16 %v177
      %v286 = vunpack.c.l.b16 %v178
      %v287 = vunpack.c.l.b16 %v179
      %v288 = vpack.c.b16 %v285, %v284
      %v289 = vpack.c.b16 %v287, %v286
      %v292 = vsel %vm224, %v194, 0
      %v295 = vsel %vm224, %v279, 0
      %297 = vmatprep.subr.bf16.mxu0 0
      %298 = vmatpush1.bf16.msra.mxu0 %v288
      %299 = vmatprep.subr.bf16.mxu0 0
      %300 = vmatpush1.bf16.msra.mxu0 %v289
      %301 = vmatprep.subr.bf16.mxu0 0
      %302 = vmatpush1.bf16.msra.mxu0 0
      %303 = vmatprep.subr.bf16.mxu0 0
      %304 = vmatpush1.bf16.msra.mxu0 0
      %305 = vmatprep.subr.bf16.mxu0 0
      %306 = vmatpush1.bf16.msra.mxu0 0
      %307 = vmatprep.subr.bf16.mxu0 0
      %308 = vmatpush1.bf16.msra.mxu0 0
      %309 = vmatprep.subr.bf16.mxu0 0
      %310 = vmatpush1.bf16.msra.mxu0 0
      %311 = vmatprep.subr.bf16.mxu0 0
      %312 = vmatpush1.bf16.msra.mxu0 0
      %313 = vmatprep.subr.bf16.mxu0 0
      %314 = vmatpush1.bf16.msra.mxu0 0
      %315 = vmatprep.subr.bf16.mxu0 0
      %316 = vmatpush1.bf16.msra.mxu0 0
      %317 = vmatprep.subr.bf16.mxu0 0
      %318 = vmatpush1.bf16.msra.mxu0 0
      %319 = vmatprep.subr.bf16.mxu0 0
      %320 = vmatpush1.bf16.msra.mxu0 0
      %321 = vmatprep.subr.bf16.mxu0 0
      %322 = vmatpush1.bf16.msra.mxu0 0
      %323 = vmatprep.subr.bf16.mxu0 0
      %324 = vmatpush1.bf16.msra.mxu0 0
      %325 = vmatprep.subr.bf16.mxu0 0
      %326 = vmatpush1.bf16.msra.mxu0 0
      %327 = vmatprep.subr.bf16.mxu0 0
      %328 = vmatpush1.bf16.msra.mxu0 0
      %329 = vmatprep.mubr.bf16.mxu0 0
      %330 = vmatmul.mubr.bf16.gmra.mrb[0].mxu0 %v292
      %v331 = vpop.f32.mrb[0].mxu0
      %v332 = vadd.f32 %v266, %v331
      %v333 = vpop.f32.mrb[0].mxu0
      %v334 = vpop.f32.mrb[0].mxu0
      %v335 = vadd.f32 %v269, %v334
      %v336 = vpop.f32.mrb[0].mxu0
      %337 = vmatprep.mubr.bf16.mxu0 0
      %338 = vmatmul.mubr.bf16.gmra.mrb[0].mxu0 %v295
      %v339 = vpop.f32.mrb[0].mxu0
      %v340 = vadd.f32 %v274, %v339
      %v341 = vpop.f32.mrb[0].mxu0
      %v342 = vpop.f32.mrb[0].mxu0
      %v343 = vpop.f32.mrb[0].mxu0
      %344 = vdwg.mxu0
      %v345 = vld [vmem:[%s165] sm:$0xe]
      %s346 = scalar_lea.vmem %s1, 32
      %v347 = vld [vmem:[%s346] sm:$0xf]
      %v348 = vld [vmem:[%s346 + $0x4] sm:$0xf]
      %v349 = vld [vmem:[%s346 + $0x8] sm:$0xf]
      %v350 = vld [vmem:[%s346 + $0xc] sm:$0xf]
      %v352 = vunpack.c.l.b16 %v345
      %v353 = vpack.c.b16 %v191, %v352
      %vm354 = vcmask 1046528
      %v355 = vrot.slane %v353, 1
      %v356 = vrot.slane %v195, 1
      %v357 = vsel %vm354, %v355, %v356
      %v362 = vunpack.c.l.b16 %v347
      %v363 = vunpack.c.l.b16 %v348
      %v364 = vunpack.c.l.b16 %v349
      %v365 = vunpack.c.l.b16 %v350
      %v366 = vpack.c.b16 %v363, %v362
      %v367 = vpack.c.b16 %v365, %v364
      %v371 = vsel %vm224, %v357, 0
      %v374 = vsel %vm224, %v356, 0
      %376 = vmatprep.subr.bf16.mxu0 0
      %377 = vmatpush1.bf16.msra.mxu0 %v366
      %378 = vmatprep.subr.bf16.mxu0 0
      %379 = vmatpush1.bf16.msra.mxu0 %v367
      %380 = vmatprep.subr.bf16.mxu0 0
      %381 = vmatpush1.bf16.msra.mxu0 0
      %382 = vmatprep.subr.bf16.mxu0 0
      %383 = vmatpush1.bf16.msra.mxu0 0
      %384 = vmatprep.subr.bf16.mxu0 0
      %385 = vmatpush1.bf16.msra.mxu0 0
      %386 = vmatprep.subr.bf16.mxu0 0
      %387 = vmatpush1.bf16.msra.mxu0 0
      %388 = vmatprep.subr.bf16.mxu0 0
      %389 = vmatpush1.bf16.msra.mxu0 0
      %390 = vmatprep.subr.bf16.mxu0 0
      %391 = vmatpush1.bf16.msra.mxu0 0
      %392 = vmatprep.subr.bf16.mxu0 0
      %393 = vmatpush1.bf16.msra.mxu0 0
      %394 = vmatprep.subr.bf16.mxu0 0
      %395 = vmatpush1.bf16.msra.mxu0 0
      %396 = vmatprep.subr.bf16.mxu0 0
      %397 = vmatpush1.bf16.msra.mxu0 0
      %398 = vmatprep.subr.bf16.mxu0 0
      %399 = vmatpush1.bf16.msra.mxu0 0
      %400 = vmatprep.subr.bf16.mxu0 0
      %401 = vmatpush1.bf16.msra.mxu0 0
      %402 = vmatprep.subr.bf16.mxu0 0
      %403 = vmatpush1.bf16.msra.mxu0 0
      %404 = vmatprep.subr.bf16.mxu0 0
      %405 = vmatpush1.bf16.msra.mxu0 0
      %406 = vmatprep.subr.bf16.mxu0 0
      %407 = vmatpush1.bf16.msra.mxu0 0
      %408 = vmatprep.mubr.bf16.mxu0 0
      %409 = vmatmul.mubr.bf16.gmra.mrb[0].mxu0 %v371
      %v410 = vpop.f32.mrb[0].mxu0
      %v411 = vadd.f32 0.0, %v410
      %v412 = vpop.f32.mrb[0].mxu0
      %v413 = vpop.f32.mrb[0].mxu0
      %v414 = vadd.f32 0.0, %v413
      %v415 = vpop.f32.mrb[0].mxu0
      %416 = vmatprep.mubr.bf16.mxu0 0
      %417 = vmatmul.mubr.bf16.gmra.mrb[0].mxu0 %v374
      %v418 = vpop.f32.mrb[0].mxu0
      %v419 = vadd.f32 0.0, %v418
      %v420 = vpop.f32.mrb[0].mxu0
      %v421 = vpop.f32.mrb[0].mxu0
      %v422 = vpop.f32.mrb[0].mxu0
      %423 = vdwg.mxu0
      %v424 = vadd.f32 %v332, %v411
      %v425 = vadd.f32 %v335, %v414
      %v426 = vadd.f32 %v340, %v419
      %v427 = vld [vmem:[%s165] sm:$0x8]
      %v428 = vld [vmem:[%s165 + $0xc] sm:$0x7]
      %s429 = scalar_lea.vmem %s1, 48
      %v430 = vld [vmem:[%s429] sm:$0xf]
      %v431 = vld [vmem:[%s429 + $0x4] sm:$0xf]
      %v432 = vld [vmem:[%s429 + $0x8] sm:$0xf]
      %v433 = vld [vmem:[%s429 + $0xc] sm:$0xf]
      %v436 = vunpack.c.l.b16 %v427
      %v437 = vunpack.c.l.b16 %v428
      %v438 = vpack.c.b16 %v191, %v436
      %v439 = vpack.c.b16 %v437, %v192
      %vm440 = vcmask 1044480
      %v441 = vrot.slane %v438, 3
      %v442 = vrot.slane %v439, 3
      %v443 = vsel %vm440, %v441, %v442
      %v448 = vunpack.c.l.b16 %v430
      %v449 = vunpack.c.l.b16 %v431
      %v450 = vunpack.c.l.b16 %v432
      %v451 = vunpack.c.l.b16 %v433
      %v452 = vpack.c.b16 %v449, %v448
      %v453 = vpack.c.b16 %v451, %v450
      %v457 = vsel %vm224, %v443, 0
      %v460 = vsel %vm224, %v442, 0
      %462 = vmatprep.subr.bf16.mxu0 0
      %463 = vmatpush1.bf16.msra.mxu0 %v452
      %464 = vmatprep.subr.bf16.mxu0 0
      %465 = vmatpush1.bf16.msra.mxu0 %v453
      %466 = vmatprep.subr.bf16.mxu0 0
      %467 = vmatpush1.bf16.msra.mxu0 0
      %468 = vmatprep.subr.bf16.mxu0 0
      %469 = vmatpush1.bf16.msra.mxu0 0
      %470 = vmatprep.subr.bf16.mxu0 0
      %471 = vmatpush1.bf16.msra.mxu0 0
      %472 = vmatprep.subr.bf16.mxu0 0
      %473 = vmatpush1.bf16.msra.mxu0 0
      %474 = vmatprep.subr.bf16.mxu0 0
      %475 = vmatpush1.bf16.msra.mxu0 0
      %476 = vmatprep.subr.bf16.mxu0 0
      %477 = vmatpush1.bf16.msra.mxu0 0
      %478 = vmatprep.subr.bf16.mxu0 0
      %479 = vmatpush1.bf16.msra.mxu0 0
      %480 = vmatprep.subr.bf16.mxu0 0
      %481 = vmatpush1.bf16.msra.mxu0 0
      %482 = vmatprep.subr.bf16.mxu0 0
      %483 = vmatpush1.bf16.msra.mxu0 0
      %484 = vmatprep.subr.bf16.mxu0 0
      %485 = vmatpush1.bf16.msra.mxu0 0
      %486 = vmatprep.subr.bf16.mxu0 0
      %487 = vmatpush1.bf16.msra.mxu0 0
      %488 = vmatprep.subr.bf16.mxu0 0
      %489 = vmatpush1.bf16.msra.mxu0 0
      %490 = vmatprep.subr.bf16.mxu0 0
      %491 = vmatpush1.bf16.msra.mxu0 0
      %492 = vmatprep.subr.bf16.mxu0 0
      %493 = vmatpush1.bf16.msra.mxu0 0
      %494 = vmatprep.mubr.bf16.mxu0 0
      %495 = vmatmul.mubr.bf16.gmra.mrb[0].mxu0 %v457
      %v496 = vpop.f32.mrb[0].mxu0
      %v497 = vadd.f32 0.0, %v496
      %v498 = vpop.f32.mrb[0].mxu0
      %v499 = vpop.f32.mrb[0].mxu0
      %v500 = vadd.f32 0.0, %v499
      %v501 = vpop.f32.mrb[0].mxu0
      %502 = vmatprep.mubr.bf16.mxu0 0
      %503 = vmatmul.mubr.bf16.gmra.mrb[0].mxu0 %v460
      %v504 = vpop.f32.mrb[0].mxu0
      %v505 = vadd.f32 0.0, %v504
      %v506 = vpop.f32.mrb[0].mxu0
      %v507 = vpop.f32.mrb[0].mxu0
      %v508 = vpop.f32.mrb[0].mxu0
      %509 = vdwg.mxu0
      %v510 = vadd.f32 %v424, %v497
      %v511 = vadd.f32 %v425, %v500
      %v512 = vadd.f32 %v426, %v505
      %v513 = vld [vmem:[%s165 + $0xc] sm:$0xf]
      %s514 = scalar_lea.vmem %s1, 64
      %v515 = vld [vmem:[%s514] sm:$0xf]
      %v516 = vld [vmem:[%s514 + $0x4] sm:$0xf]
      %v517 = vld [vmem:[%s514 + $0x8] sm:$0xf]
      %v518 = vld [vmem:[%s514 + $0xc] sm:$0xf]
      %v520 = vunpack.c.l.b16 %v513
      %v521 = vpack.c.b16 %v520, %v192
      %vm522 = vsmask.f32 4352
      %v524 = vshrl.u32 %v438, 16
      %v526 = vrot.slane %v524, 3
      %v527 = vshll.u32 %v438, 16
      %v529 = vrot.slane %v527, 4
      %v530 = vor.u32 %v526, %v529
      %v532 = vshrl.u32 %v521, 16
      %v534 = vrot.slane %v532, 3
      %v535 = vshll.u32 %v521, 16
      %v537 = vrot.slane %v535, 4
      %v538 = vor.u32 %v534, %v537
      %v539 = vsel %vm522, %v530, %v538
      %v544 = vunpack.c.l.b16 %v515
      %v545 = vunpack.c.l.b16 %v516
      %v546 = vunpack.c.l.b16 %v517
      %v547 = vunpack.c.l.b16 %v518
      %v548 = vpack.c.b16 %v545, %v544
      %v549 = vpack.c.b16 %v547, %v546
      %v553 = vsel %vm224, %v539, 0
      %v556 = vsel %vm224, %v538, 0
      %558 = vmatprep.subr.bf16.mxu0 0
      %559 = vmatpush1.bf16.msra.mxu0 %v548
      %560 = vmatprep.subr.bf16.mxu0 0
      %561 = vmatpush1.bf16.msra.mxu0 %v549
      %562 = vmatprep.subr.bf16.mxu0 0
      %563 = vmatpush1.bf16.msra.mxu0 0
      %564 = vmatprep.subr.bf16.mxu0 0
      %565 = vmatpush1.bf16.msra.mxu0 0
      %566 = vmatprep.subr.bf16.mxu0 0
      %567 = vmatpush1.bf16.msra.mxu0 0
      %568 = vmatprep.subr.bf16.mxu0 0
      %569 = vmatpush1.bf16.msra.mxu0 0
      %570 = vmatprep.subr.bf16.mxu0 0
      %571 = vmatpush1.bf16.msra.mxu0 0
      %572 = vmatprep.subr.bf16.mxu0 0
      %573 = vmatpush1.bf16.msra.mxu0 0
      %574 = vmatprep.subr.bf16.mxu0 0
      %575 = vmatpush1.bf16.msra.mxu0 0
      %576 = vmatprep.subr.bf16.mxu0 0
      %577 = vmatpush1.bf16.msra.mxu0 0
      %578 = vmatprep.subr.bf16.mxu0 0
      %579 = vmatpush1.bf16.msra.mxu0 0
      %580 = vmatprep.subr.bf16.mxu0 0
      %581 = vmatpush1.bf16.msra.mxu0 0
      %582 = vmatprep.subr.bf16.mxu0 0
      %583 = vmatpush1.bf16.msra.mxu0 0
      %584 = vmatprep.subr.bf16.mxu0 0
      %585 = vmatpush1.bf16.msra.mxu0 0
      %586 = vmatprep.subr.bf16.mxu0 0
      %587 = vmatpush1.bf16.msra.mxu0 0
      %588 = vmatprep.subr.bf16.mxu0 0
      %589 = vmatpush1.bf16.msra.mxu0 0
      %590 = vmatprep.mubr.bf16.mxu0 0
      %591 = vmatmul.mubr.bf16.gmra.mrb[0].mxu0 %v553
      %v592 = vpop.f32.mrb[0].mxu0
      %v593 = vadd.f32 0.0, %v592
      %v594 = vpop.f32.mrb[0].mxu0
      %v595 = vpop.f32.mrb[0].mxu0
      %v596 = vadd.f32 0.0, %v595
      %v597 = vpop.f32.mrb[0].mxu0
      %598 = vmatprep.mubr.bf16.mxu0 0
      %599 = vmatmul.mubr.bf16.gmra.mrb[0].mxu0 %v556
      %v600 = vpop.f32.mrb[0].mxu0
      %v601 = vadd.f32 0.0, %v600
      %v602 = vpop.f32.mrb[0].mxu0
      %v603 = vpop.f32.mrb[0].mxu0
      %v604 = vpop.f32.mrb[0].mxu0
      %605 = vdwg.mxu0
      %v606 = vadd.f32 %v510, %v593
      %v607 = vadd.f32 %v511, %v596
      %v608 = vadd.f32 %v512, %v601
      %s609 = scalar_lea.vmem %s1, 80
      %v610 = vld [vmem:[%s609] sm:$0xf]
      %v611 = vld [vmem:[%s609 + $0x4] sm:$0xf]
      %v612 = vld [vmem:[%s609 + $0x8] sm:$0xf]
      %v613 = vld [vmem:[%s609 + $0xc] sm:$0xf]
      %v614 = vpack.c.b16 %v192, %v191
      %v615 = vpack.c.b16 %v520, %v520
      %v620 = vunpack.c.l.b16 %v610
      %v621 = vunpack.c.l.b16 %v611
      %v622 = vunpack.c.l.b16 %v612
      %v623 = vunpack.c.l.b16 %v613
      %v624 = vpack.c.b16 %v621, %v620
      %v625 = vpack.c.b16 %v623, %v622
      %v629 = vsel %vm224, %v614, 0
      %v632 = vsel %vm224, %v615, 0
      %634 = vmatprep.subr.bf16.mxu0 0
      %635 = vmatpush1.bf16.msra.mxu0 %v624
      %636 = vmatprep.subr.bf16.mxu0 0
      %637 = vmatpush1.bf16.msra.mxu0 %v625
      %638 = vmatprep.subr.bf16.mxu0 0
      %639 = vmatpush1.bf16.msra.mxu0 0
      %640 = vmatprep.subr.bf16.mxu0 0
      %641 = vmatpush1.bf16.msra.mxu0 0
      %642 = vmatprep.subr.bf16.mxu0 0
      %643 = vmatpush1.bf16.msra.mxu0 0
      %644 = vmatprep.subr.bf16.mxu0 0
      %645 = vmatpush1.bf16.msra.mxu0 0
      %646 = vmatprep.subr.bf16.mxu0 0
      %647 = vmatpush1.bf16.msra.mxu0 0
      %648 = vmatprep.subr.bf16.mxu0 0
      %649 = vmatpush1.bf16.msra.mxu0 0
      %650 = vmatprep.subr.bf16.mxu0 0
      %651 = vmatpush1.bf16.msra.mxu0 0
      %652 = vmatprep.subr.bf16.mxu0 0
      %653 = vmatpush1.bf16.msra.mxu0 0
      %654 = vmatprep.subr.bf16.mxu0 0
      %655 = vmatpush1.bf16.msra.mxu0 0
      %656 = vmatprep.subr.bf16.mxu0 0
      %657 = vmatpush1.bf16.msra.mxu0 0
      %658 = vmatprep.subr.bf16.mxu0 0
      %659 = vmatpush1.bf16.msra.mxu0 0
      %660 = vmatprep.subr.bf16.mxu0 0
      %661 = vmatpush1.bf16.msra.mxu0 0
      %662 = vmatprep.subr.bf16.mxu0 0
      %663 = vmatpush1.bf16.msra.mxu0 0
      %664 = vmatprep.subr.bf16.mxu0 0
      %665 = vmatpush1.bf16.msra.mxu0 0
      %666 = vmatprep.mubr.bf16.mxu0 0
      %667 = vmatmul.mubr.bf16.gmra.mrb[0].mxu0 %v629
      %v668 = vpop.f32.mrb[0].mxu0
      %v669 = vadd.f32 0.0, %v668
      %v670 = vpop.f32.mrb[0].mxu0
      %v671 = vpop.f32.mrb[0].mxu0
      %v672 = vadd.f32 0.0, %v671
      %v673 = vpop.f32.mrb[0].mxu0
      %674 = vmatprep.mubr.bf16.mxu0 0
      %675 = vmatmul.mubr.bf16.gmra.mrb[0].mxu0 %v632
      %v676 = vpop.f32.mrb[0].mxu0
      %v677 = vadd.f32 0.0, %v676
      %v678 = vpop.f32.mrb[0].mxu0
      %v679 = vpop.f32.mrb[0].mxu0
      %v680 = vpop.f32.mrb[0].mxu0
      %681 = vdwg.mxu0
      %v682 = vadd.f32 %v606, %v669
      %v683 = vadd.f32 %v607, %v672
      %v684 = vadd.f32 %v608, %v677
      %v685 = vld [vmem:[%s165 + $0x4] sm:$0xc]
      %v686 = vld [vmem:[%s165 + $0x8] sm:$0xf]
      %v687 = vld [vmem:[%s165 + $0xc] sm:$0xf]
      %v688 = vld [vmem:[%s165 + $0x10] sm:$0x3]
      %s689 = scalar_lea.vmem %s1, 96
      %v690 = vld [vmem:[%s689] sm:$0xf]
      %v691 = vld [vmem:[%s689 + $0x4] sm:$0xf]
      %v692 = vld [vmem:[%s689 + $0x8] sm:$0xf]
      %v693 = vld [vmem:[%s689 + $0xc] sm:$0xf]
      %v698 = vunpack.c.l.b16 %v685
      %v699 = vunpack.c.l.b16 %v686
      %v700 = vunpack.c.l.b16 %v687
      %v701 = vunpack.c.l.b16 %v688
      %v702 = vpack.c.b16 %v699, %v698
      %v703 = vpack.c.b16 %v701, %v700
      %vm704 = vcmask 1045504
      %v705 = vrot.slane %v702, 2
      %v706 = vrot.slane %v703, 2
      %v707 = vsel %vm704, %v705, %v706
      %v712 = vunpack.c.l.b16 %v690
      %v713 = vunpack.c.l.b16 %v691
      %v714 = vunpack.c.l.b16 %v692
      %v715 = vunpack.c.l.b16 %v693
      %v716 = vpack.c.b16 %v713, %v712
      %v717 = vpack.c.b16 %v715, %v714
      %v721 = vsel %vm224, %v707, 0
      %v724 = vsel %vm224, %v706, 0
      %726 = vmatprep.subr.bf16.mxu0 0
      %727 = vmatpush1.bf16.msra.mxu0 %v716
      %728 = vmatprep.subr.bf16.mxu0 0
      %729 = vmatpush1.bf16.msra.mxu0 %v717
      %730 = vmatprep.subr.bf16.mxu0 0
      %731 = vmatpush1.bf16.msra.mxu0 0
      %732 = vmatprep.subr.bf16.mxu0 0
      %733 = vmatpush1.bf16.msra.mxu0 0
      %734 = vmatprep.subr.bf16.mxu0 0
      %735 = vmatpush1.bf16.msra.mxu0 0
      %736 = vmatprep.subr.bf16.mxu0 0
      %737 = vmatpush1.bf16.msra.mxu0 0
      %738 = vmatprep.subr.bf16.mxu0 0
      %739 = vmatpush1.bf16.msra.mxu0 0
      %740 = vmatprep.subr.bf16.mxu0 0
      %741 = vmatpush1.bf16.msra.mxu0 0
      %742 = vmatprep.subr.bf16.mxu0 0
      %743 = vmatpush1.bf16.msra.mxu0 0
      %744 = vmatprep.subr.bf16.mxu0 0
      %745 = vmatpush1.bf16.msra.mxu0 0
      %746 = vmatprep.subr.bf16.mxu0 0
      %747 = vmatpush1.bf16.msra.mxu0 0
      %748 = vmatprep.subr.bf16.mxu0 0
      %749 = vmatpush1.bf16.msra.mxu0 0
      %750 = vmatprep.subr.bf16.mxu0 0
      %751 = vmatpush1.bf16.msra.mxu0 0
      %752 = vmatprep.subr.bf16.mxu0 0
      %753 = vmatpush1.bf16.msra.mxu0 0
      %754 = vmatprep.subr.bf16.mxu0 0
      %755 = vmatpush1.bf16.msra.mxu0 0
      %756 = vmatprep.subr.bf16.mxu0 0
      %757 = vmatpush1.bf16.msra.mxu0 0
      %758 = vmatprep.mubr.bf16.mxu0 0
      %759 = vmatmul.mubr.bf16.gmra.mrb[0].mxu0 %v721
      %v760 = vpop.f32.mrb[0].mxu0
      %v761 = vadd.f32 0.0, %v760
      %v762 = vpop.f32.mrb[0].mxu0
      %v763 = vpop.f32.mrb[0].mxu0
      %v764 = vadd.f32 0.0, %v763
      %v765 = vpop.f32.mrb[0].mxu0
      %766 = vmatprep.mubr.bf16.mxu0 0
      %767 = vmatmul.mubr.bf16.gmra.mrb[0].mxu0 %v724
      %v768 = vpop.f32.mrb[0].mxu0
      %v769 = vadd.f32 0.0, %v768
      %v770 = vpop.f32.mrb[0].mxu0
      %v771 = vpop.f32.mrb[0].mxu0
      %v772 = vpop.f32.mrb[0].mxu0
      %773 = vdwg.mxu0
      %v774 = vadd.f32 %v682, %v761
      %v775 = vadd.f32 %v683, %v764
      %v776 = vadd.f32 %v684, %v769
      %v777 = vld [vmem:[%s165 + $0x10] sm:$0x7]
      %s778 = scalar_lea.vmem %s1, 112
      %v779 = vld [vmem:[%s778] sm:$0xf]
      %v780 = vld [vmem:[%s778 + $0x4] sm:$0xf]
      %v781 = vld [vmem:[%s778 + $0x8] sm:$0xf]
      %v782 = vld [vmem:[%s778 + $0xc] sm:$0xf]
      %v784 = vunpack.c.l.b16 %v777
      %v785 = vpack.c.b16 %v784, %v700
      %vm786 = vsmask.f32 5376
      %v788 = vshrl.u32 %v702, 16
      %v790 = vrot.slane %v788, 2
      %v791 = vshll.u32 %v702, 16
      %v793 = vrot.slane %v791, 3
      %v794 = vor.u32 %v790, %v793
      %v796 = vshrl.u32 %v785, 16
      %v798 = vrot.slane %v796, 2
      %v799 = vshll.u32 %v785, 16
      %v801 = vrot.slane %v799, 3
      %v802 = vor.u32 %v798, %v801
      %v803 = vsel %vm786, %v794, %v802
      %v808 = vunpack.c.l.b16 %v779
      %v809 = vunpack.c.l.b16 %v780
      %v810 = vunpack.c.l.b16 %v781
      %v811 = vunpack.c.l.b16 %v782
      %v812 = vpack.c.b16 %v809, %v808
      %v813 = vpack.c.b16 %v811, %v810
      %v817 = vsel %vm224, %v803, 0
      %v820 = vsel %vm224, %v802, 0
      %822 = vmatprep.subr.bf16.mxu0 0
      %823 = vmatpush1.bf16.msra.mxu0 %v812
      %824 = vmatprep.subr.bf16.mxu0 0
      %825 = vmatpush1.bf16.msra.mxu0 %v813
      %826 = vmatprep.subr.bf16.mxu0 0
      %827 = vmatpush1.bf16.msra.mxu0 0
      %828 = vmatprep.subr.bf16.mxu0 0
      %829 = vmatpush1.bf16.msra.mxu0 0
      %830 = vmatprep.subr.bf16.mxu0 0
      %831 = vmatpush1.bf16.msra.mxu0 0
      %832 = vmatprep.subr.bf16.mxu0 0
      %833 = vmatpush1.bf16.msra.mxu0 0
      %834 = vmatprep.subr.bf16.mxu0 0
      %835 = vmatpush1.bf16.msra.mxu0 0
      %836 = vmatprep.subr.bf16.mxu0 0
      %837 = vmatpush1.bf16.msra.mxu0 0
      %838 = vmatprep.subr.bf16.mxu0 0
      %839 = vmatpush1.bf16.msra.mxu0 0
      %840 = vmatprep.subr.bf16.mxu0 0
      %841 = vmatpush1.bf16.msra.mxu0 0
      %842 = vmatprep.subr.bf16.mxu0 0
      %843 = vmatpush1.bf16.msra.mxu0 0
      %844 = vmatprep.subr.bf16.mxu0 0
      %845 = vmatpush1.bf16.msra.mxu0 0
      %846 = vmatprep.subr.bf16.mxu0 0
      %847 = vmatpush1.bf16.msra.mxu0 0
      %848 = vmatprep.subr.bf16.mxu0 0
      %849 = vmatpush1.bf16.msra.mxu0 0
      %850 = vmatprep.subr.bf16.mxu0 0
      %851 = vmatpush1.bf16.msra.mxu0 0
      %852 = vmatprep.subr.bf16.mxu0 0
      %853 = vmatpush1.bf16.msra.mxu0 0
      %854 = vmatprep.mubr.bf16.mxu0 0
      %855 = vmatmul.mubr.bf16.gmra.mrb[0].mxu0 %v817
      %v856 = vpop.f32.mrb[0].mxu0
      %v857 = vadd.f32 0.0, %v856
      %v858 = vpop.f32.mrb[0].mxu0
      %v859 = vpop.f32.mrb[0].mxu0
      %v860 = vadd.f32 0.0, %v859
      %v861 = vpop.f32.mrb[0].mxu0
      %862 = vmatprep.mubr.bf16.mxu0 0
      %863 = vmatmul.mubr.bf16.gmra.mrb[0].mxu0 %v820
      %v864 = vpop.f32.mrb[0].mxu0
      %v865 = vadd.f32 0.0, %v864
      %v866 = vpop.f32.mrb[0].mxu0
      %v867 = vpop.f32.mrb[0].mxu0
      %v868 = vpop.f32.mrb[0].mxu0
      %869 = vdwg.mxu0
      %v870 = vadd.f32 %v774, %v857
      %v871 = vadd.f32 %v775, %v860
      %v872 = vadd.f32 %v776, %v865
      %v873 = vld [vmem:[%s165 + $0x4] sm:$0x8]
      %s874 = scalar_lea.vmem %s1, 128
      %v875 = vld [vmem:[%s874] sm:$0xf]
      %v876 = vld [vmem:[%s874 + $0x4] sm:$0xf]
      %v877 = vld [vmem:[%s874 + $0x8] sm:$0xf]
      %v878 = vld [vmem:[%s874 + $0xc] sm:$0xf]
      %v880 = vunpack.c.l.b16 %v873
      %v881 = vpack.c.b16 %v699, %v880
      %v882 = vrot.slane %v881, 3
      %v883 = vrot.slane %v785, 3
      %v884 = vsel %vm440, %v882, %v883
      %v889 = vunpack.c.l.b16 %v875
      %v890 = vunpack.c.l.b16 %v876
      %v891 = vunpack.c.l.b16 %v877
      %v892 = vunpack.c.l.b16 %v878
      %v893 = vpack.c.b16 %v890, %v889
      %v894 = vpack.c.b16 %v892, %v891
      %v898 = vsel %vm224, %v884, 0
      %v901 = vsel %vm224, %v883, 0
      %903 = vmatprep.subr.bf16.mxu0 0
      %904 = vmatpush1.bf16.msra.mxu0 %v893
      %905 = vmatprep.subr.bf16.mxu0 0
      %906 = vmatpush1.bf16.msra.mxu0 %v894
      %907 = vmatprep.subr.bf16.mxu0 0
      %908 = vmatpush1.bf16.msra.mxu0 0
      %909 = vmatprep.subr.bf16.mxu0 0
      %910 = vmatpush1.bf16.msra.mxu0 0
      %911 = vmatprep.subr.bf16.mxu0 0
      %912 = vmatpush1.bf16.msra.mxu0 0
      %913 = vmatprep.subr.bf16.mxu0 0
      %914 = vmatpush1.bf16.msra.mxu0 0
      %915 = vmatprep.subr.bf16.mxu0 0
      %916 = vmatpush1.bf16.msra.mxu0 0
      %917 = vmatprep.subr.bf16.mxu0 0
      %918 = vmatpush1.bf16.msra.mxu0 0
      %919 = vmatprep.subr.bf16.mxu0 0
      %920 = vmatpush1.bf16.msra.mxu0 0
      %921 = vmatprep.subr.bf16.mxu0 0
      %922 = vmatpush1.bf16.msra.mxu0 0
      %923 = vmatprep.subr.bf16.mxu0 0
      %924 = vmatpush1.bf16.msra.mxu0 0
      %925 = vmatprep.subr.bf16.mxu0 0
      %926 = vmatpush1.bf16.msra.mxu0 0
      %927 = vmatprep.subr.bf16.mxu0 0
      %928 = vmatpush1.bf16.msra.mxu0 0
      %929 = vmatprep.subr.bf16.mxu0 0
      %930 = vmatpush1.bf16.msra.mxu0 0
      %931 = vmatprep.subr.bf16.mxu0 0
      %932 = vmatpush1.bf16.msra.mxu0 0
      %933 = vmatprep.subr.bf16.mxu0 0
      %934 = vmatpush1.bf16.msra.mxu0 0
      %935 = vmatprep.mubr.bf16.mxu0 0
      %936 = vmatmul.mubr.bf16.gmra.mrb[0].mxu0 %v898
      %v937 = vpop.f32.mrb[0].mxu0
      %v938 = vadd.f32 0.0, %v937
      %v939 = vpop.f32.mrb[0].mxu0
      %v940 = vpop.f32.mrb[0].mxu0
      %v941 = vadd.f32 0.0, %v940
      %v942 = vpop.f32.mrb[0].mxu0
      %943 = vmatprep.mubr.bf16.mxu0 0
      %944 = vmatmul.mubr.bf16.gmra.mrb[0].mxu0 %v901
      %v945 = vpop.f32.mrb[0].mxu0
      %v946 = vadd.f32 0.0, %v945
      %v947 = vpop.f32.mrb[0].mxu0
      %v948 = vpop.f32.mrb[0].mxu0
      %v949 = vpop.f32.mrb[0].mxu0
      %950 = vdwg.mxu0
      %v951 = vadd.f32 %v870, %v938
      %v952 = vadd.f32 %v871, %v941
      %v953 = vadd.f32 %v872, %v946
      %v955 = vlaneseq
      %v956 = vshrl.u32 %v955, 7
      %v957 = vsub.s32 0, %v956
      %v958 = vrot.slane %v172, %v957
      %v960 = vadd.f32 %v951, %v958
      %v961 = vadd.f32 %v952, %v958
      %v962 = vadd.f32 %v953, %v958
      %v963 = vmax.f32 %v960, 0.0
      %v964 = vmax.f32 %v961, 0.0
      %v965 = vmax.f32 %v962, 0.0
      %v966 = vpack.c.bf16 %v964, %v963
      %v967 = vpack.c.bf16 %v965, %v965
      %v970 = vunpack.c.l.b16 %v966
      %v971 = vunpack.c.h.b16 %v966
      %v972 = vunpack.c.l.b16 %v967
      %v973 = vpack.c.b16 %v970, %v970
      %v974 = vpack.c.b16 %v971, %v971
      %v975 = vpack.c.b16 %v972, %v972
      %979 = vst [vmem:[%s170] sm:$0xf] %v973
      %980 = vst [vmem:[%s170 + $0x4] sm:$0xf] %v974
      %981 = vst [vmem:[%s170 + $0x8] sm:$0xf] %v975
      %p982 = scmp.lt.s32.totalorder %s14, 1
      %s983 = scalar_select %p982, %s14, 1
      %s984 = smul.addr %s983, 3
      %s985 = smul.addr %s984, 4
      %s986 = scalar_lea.vmem %s3, %s985
      // Predicated region
      $region33: #{decoder_forward.4} parent=31 // pred_check
        %p987 = pneg %p100
      $region34: #{decoder_forward.4} parent=31 // pred_check_branch
        %989 = sbr.rel (%p987) target = $region36
      $region35: #{decoder_forward.4} parent=31 // pred_region
        _
      $region36: #{decoder_forward.4} parent=31 // pred_fallthru
        _
    $region32: #{decoder_forward.4} parent=5 // pred_fallthru
      _
    %p990 = scmp.le.s32.totalorder 2, %s9
    // Predicated region
    $region37: #{decoder_forward.4} parent=5 // pred_check
      %p991 = pneg %p990
    $region38: #{decoder_forward.4} parent=5 // pred_check_branch
      %993 = sbr.rel (%p991) target = $region40
    $region39: #{decoder_forward.4} parent=5 // pred_region
      %s994 = ssub.s32 %s9, 2
      // Predicated region
      $region41: #{decoder_forward.4} parent=39 // pred_check
        %p995 = pneg %p106
      $region42: #{decoder_forward.4} parent=39 // pred_check_branch
        %997 = sbr.rel (%p995) target = $region44
      $region43: #{decoder_forward.4} parent=39 // pred_region
        %p998 = scmp.lt.s32.totalorder %s15, 1
        %s999 = scalar_select %p998, %s15, 1
        %s1000 = smul.addr %s999, 3
        %s1001 = smul.addr %s1000, 4
        %s1002 = scalar_lea.vmem %s3, %s1001
      $region44: #{decoder_forward.4} parent=39 // pred_fallthru
        _
    $region40: #{decoder_forward.4} parent=5 // pred_fallthru
      _
  $region6: #{decoder_forward.4} parent=0 // loop_footer
    %s13 = sadd.s32 1, %s9
  $region7: #{decoder_forward.4} parent=0 // loop_footer_branch
    %8 = sbr.rel target = $region3
  $region8: #{decoder_forward.4} parent=0 // loop_exit
    _

// kernel: decoder_forward.5
$region0: #{decoder_forward.5}
  #allocation0 [shape = 'u32[]', space=smem, size = 0x4, offset = 0x4, fixed_abs, tag = 'smem constant byte address 0x4 - core index']
  #allocation1 [shape = 'u32[144,128]{1,0:T(1,128)}', space=vmem, size = 0x12000, scoped, tag = 'internal scratch']
  %s0 = inlined_call_operand.vmem [shape: bf16[2,108,16], index: 0, kind: input, shape index: {}]
  %s1 = inlined_call_operand.vmem [shape: bf16[9,16,128], index: 1, kind: input, shape index: {}]
  %s2 = inlined_call_operand.vmem [shape: f32[1,128], index: 2, kind: input, shape index: {}]
  %s3 = inlined_call_operand.vmem [shape: bf16[2,80,128], index: 3, kind: output, shape index: {}]
  %s4 = sld [smem:[#allocation0]]
  $region45: #{decoder_forward.5} parent=0
    _
  %s6 = ssub.s32 1, %s4
  %s7 = scalar_select 0, %s6, %s4
  loop: start=0, step=1, limit=4
  $region2: #{decoder_forward.5} parent=0 // loop_pre_header
    _
  $region3: #{decoder_forward.5} parent=0 // loop_header
    %s9 = sphi 0, %s13
    %p10 = scmp.ge.s32.totalorder %s9, 4
    %s19 = sphi 0, %s21
    %s22 = sphi 0, %s19
    %s23 = sphi 0, %s22
    %s39 = sphi 0, %s23
    %s43 = sphi 0, %s43
    %s45 = sphi 0, %s43
    %s46 = sphi 0, %s45
    %s60 = sphi 0, %s46
    %s64 = sphi 0, %s64
    %s66 = sphi 0, %s64
    %s67 = sphi 0, %s66
    %s81 = sphi 0, %s67
    %s87 = sphi 0, %s89
    %s90 = sphi 0, %s87
    %s91 = sphi 0, %s90
    %s107 = sphi 0, %s91
  $region4: #{decoder_forward.5} parent=0 // loop_header_branch
    %12 = sbr.rel (%p10) target = $region8
  $region5: #{decoder_forward.5} parent=0 // loop_body
    %s14 = ssub.s32 %s9, 1
    %s15 = ssub.s32 %s9, 2
    %s16 = sadd.s32 %s9, 1
    %s17 = ssub.s32 %s9, %s16
    %p18 = scmp.eq.s32.totalorder %s17, 0
    %s20 = sadd.s32 %s19, 1
    %s21 = scalar_select %p18, %s19, %s20
    %p24 = pneg %p18
    %p25 = scmp.eq.s32.totalorder %s9, 1
    %p26 = por %p24, %p25
    %p27 = scmp.ne.s32.totalorder %s19, %s22
    %p28 = scmp.eq.s32.totalorder %s9, 0
    %p29 = por %p27, %p28
    %p30 = scmp.ne.s32.totalorder %s19, %s22
    %p31 = scmp.eq.s32.totalorder %s14, 1
    %p32 = por %p30, %p31
    %p33 = scmp.ne.s32.totalorder %s22, %s23
    %p34 = scmp.eq.s32.totalorder %s14, 0
    %p35 = por %p33, %p34
    %p36 = scmp.ne.s32.totalorder %s22, %s23
    %p37 = scmp.eq.s32.totalorder %s15, 1
    %p38 = por %p36, %p37
    %p40 = scmp.ne.s32.totalorder %s23, %s39
    %p41 = scmp.eq.s32.totalorder %s15, 0
    %p42 = por %p40, %p41
    %s44 = sadd.s32 %s43, 1
    %p47 = scmp.eq.s32.totalorder %s9, 1
    %p48 = scmp.ne.s32.totalorder %s43, %s45
    %p49 = scmp.eq.s32.totalorder %s9, 0
    %p50 = por %p48, %p49
    %p51 = scmp.ne.s32.totalorder %s43, %s45
    %p52 = scmp.eq.s32.totalorder %s14, 1
    %p53 = por %p51, %p52
    %p54 = scmp.ne.s32.totalorder %s45, %s46
    %p55 = scmp.eq.s32.totalorder %s14, 0
    %p56 = por %p54, %p55
    %p57 = scmp.ne.s32.totalorder %s45, %s46
    %p58 = scmp.eq.s32.totalorder %s15, 1
    %p59 = por %p57, %p58
    %p61 = scmp.ne.s32.totalorder %s46, %s60
    %p62 = scmp.eq.s32.totalorder %s15, 0
    %p63 = por %p61, %p62
    %s65 = sadd.s32 %s64, 1
    %p68 = scmp.eq.s32.totalorder %s9, 1
    %p69 = scmp.ne.s32.totalorder %s64, %s66
    %p70 = scmp.eq.s32.totalorder %s9, 0
    %p71 = por %p69, %p70
    %p72 = scmp.ne.s32.totalorder %s64, %s66
    %p73 = scmp.eq.s32.totalorder %s14, 1
    %p74 = por %p72, %p73
    %p75 = scmp.ne.s32.totalorder %s66, %s67
    %p76 = scmp.eq.s32.totalorder %s14, 0
    %p77 = por %p75, %p76
    %p78 = scmp.ne.s32.totalorder %s66, %s67
    %p79 = scmp.eq.s32.totalorder %s15, 1
    %p80 = por %p78, %p79
    %p82 = scmp.ne.s32.totalorder %s67, %s81
    %p83 = scmp.eq.s32.totalorder %s15, 0
    %p84 = por %p82, %p83
    %s85 = ssub.s32 %s9, %s16
    %p86 = scmp.eq.s32.totalorder %s85, 0
    %s88 = sadd.s32 %s87, 1
    %s89 = scalar_select %p86, %s87, %s88
    %p92 = pneg %p86
    %p93 = scmp.eq.s32.totalorder %s9, 1
    %p94 = por %p92, %p93
    %p95 = scmp.ne.s32.totalorder %s87, %s90
    %p96 = scmp.eq.s32.totalorder %s9, 0
    %p97 = por %p95, %p96
    %p98 = scmp.ne.s32.totalorder %s87, %s90
    %p99 = scmp.eq.s32.totalorder %s14, 1
    %p100 = por %p98, %p99
    %p101 = scmp.ne.s32.totalorder %s90, %s91
    %p102 = scmp.eq.s32.totalorder %s14, 0
    %p103 = por %p101, %p102
    %p104 = scmp.ne.s32.totalorder %s90, %s91
    %p105 = scmp.eq.s32.totalorder %s15, 1
    %p106 = por %p104, %p105
    %p108 = scmp.ne.s32.totalorder %s91, %s107
    %p109 = scmp.eq.s32.totalorder %s15, 0
    %p110 = por %p108, %p109
    %p111 = scmp.le.s32.totalorder 1, %s9
    %p112 = scmp.lt.s32.totalorder %s9, 3
    %p113 = pnand %p111, %p112
    %p114 = pneg %p113
    // Predicated region
    $region9: #{decoder_forward.5} parent=5 // pred_check
      _
    $region10: #{decoder_forward.5} parent=5 // pred_check_branch
      %116 = sbr.rel (%p113) target = $region12
    $region11: #{decoder_forward.5} parent=5 // pred_region
      %s117 = ssub.s32 %s9, 1
      // Predicated region
      $region13: #{decoder_forward.5} parent=11 // pred_check
        %p118 = pneg %p56
      $region14: #{decoder_forward.5} parent=11 // pred_check_branch
        %120 = sbr.rel (%p118) target = $region16
      $region15: #{decoder_forward.5} parent=11 // pred_region
        _
      $region16: #{decoder_forward.5} parent=11 // pred_fallthru
        _
      // Predicated region
      $region17: #{decoder_forward.5} parent=11 // pred_check
        %p121 = pneg %p77
      $region18: #{decoder_forward.5} parent=11 // pred_check_branch
        %123 = sbr.rel (%p121) target = $region20
      $region19: #{decoder_forward.5} parent=11 // pred_region
        _
      $region20: #{decoder_forward.5} parent=11 // pred_fallthru
        _
    $region12: #{decoder_forward.5} parent=5 // pred_fallthru
      _
    %p124 = scmp.lt.s32.totalorder %s9, 2
    // Predicated region
    $region21: #{decoder_forward.5} parent=5 // pred_check
      %p125 = pneg %p124
    $region22: #{decoder_forward.5} parent=5 // pred_check_branch
      %127 = sbr.rel (%p125) target = $region24
    $region23: #{decoder_forward.5} parent=5 // pred_region
      // Predicated region
      $region25: #{decoder_forward.5} parent=23 // pred_check
        %p128 = pneg %p29
      $region26: #{decoder_forward.5} parent=23 // pred_check_branch
        %130 = sbr.rel (%p128) target = $region28
      $region27: #{decoder_forward.5} parent=23 // pred_region
        %p131 = scmp.lt.s32.totalorder %s9, 1
        %s132 = scalar_select %p131, %s9, 1
        %s133 = smul.addr %s132, 14
        %s134 = smul.addr %s133, 4
        %s135 = scalar_lea.vmem %s0, %s134
      $region28: #{decoder_forward.5} parent=23 // pred_fallthru
        _
    $region24: #{decoder_forward.5} parent=5 // pred_fallthru
      _
    %p136 = scmp.le.s32.totalorder 1, %s9
    %p137 = scmp.lt.s32.totalorder %s9, 3
    %p138 = pnand %p136, %p137
    %p139 = pneg %p138
    // Predicated region
    $region29: #{decoder_forward.5} parent=5 // pred_check
      _
    $region30: #{decoder_forward.5} parent=5 // pred_check_branch
      %141 = sbr.rel (%p138) target = $region32
    $region31: #{decoder_forward.5} parent=5 // pred_region
      %s142 = ssub.s32 %s9, 1
      %p143 = scmp.lt.s32.totalorder %s14, 1
      %s144 = scalar_select %p143, %s14, 1
      %s145 = smul.addr %s144, 14
      %s146 = smul.addr %s145, 4
      %s147 = scalar_lea.vmem %s0, %s146
      %p148 = pneg %p35
      %p149 = pneg %p32
      %p150 = pneg %p56
      %p151 = pneg %p53
      %p152 = pneg %p77
      %p153 = pneg %p74
      %p154 = pneg %p103
      %p155 = pneg %p100
      %p156 = scmp.lt.s32.totalorder %s14, 1
      %s157 = scalar_select %p156, %s14, 1
      %s158 = smul.addr %s157, 10
      %s159 = smul.addr %s158, 4
      %s160 = scalar_lea.vmem %s3, %s159
      %p161 = scmp.lt.s32.totalorder %s14, 1
      %s162 = scalar_select %p161, %s14, 1
      %s163 = smul.addr %s162, 14
      %s164 = smul.addr %s163, 4
      %s165 = scalar_lea.vmem %s0, %s164
      %p166 = scmp.lt.s32.totalorder %s14, 1
      %s167 = scalar_select %p166, %s14, 1
      %s168 = smul.addr %s167, 10
      %s169 = smul.addr %s168, 4
      %s170 = scalar_lea.vmem %s3, %s169
      %v172 = vld [vmem:[%s2] sm:$0x1]
      %v173 = vld [vmem:[%s165] sm:$0xf]
      %v174 = vld [vmem:[%s165 + $0x4] sm:$0xf]
      %v175 = vld [vmem:[%s165 + $0x8] sm:$0xf]
      %v176 = vld [vmem:[%s165 + $0xc] sm:$0xf]
      %v177 = vld [vmem:[%s165 + $0x10] sm:$0xf]
      %v178 = vld [vmem:[%s165 + $0x14] sm:$0xf]
      %v179 = vld [vmem:[%s165 + $0x18] sm:$0xf]
      %v180 = vld [vmem:[%s165 + $0x1c] sm:$0xf]
      %v181 = vld [vmem:[%s165 + $0x20] sm:$0xf]
      %v182 = vld [vmem:[%s165 + $0x24] sm:$0xf]
      %v183 = vld [vmem:[%s1] sm:$0xf]
      %v184 = vld [vmem:[%s1 + $0x4] sm:$0xf]
      %v185 = vld [vmem:[%s165 + $0x28] sm:$0x1]
      %s186 = scalar_lea.vmem %s1, 8
      %v187 = vld [vmem:[%s186] sm:$0xf]
      %v188 = vld [vmem:[%s186 + $0x4] sm:$0xf]
      %v200 = vunpack.c.l.b16 %v173
      %v201 = vunpack.c.l.b16 %v174
      %v202 = vunpack.c.l.b16 %v175
      %v203 = vunpack.c.l.b16 %v176
      %v204 = vunpack.c.l.b16 %v177
      %v205 = vunpack.c.l.b16 %v178
      %v206 = vunpack.c.l.b16 %v179
      %v207 = vunpack.c.l.b16 %v180
      %v208 = vunpack.c.l.b16 %v181
      %v209 = vunpack.c.l.b16 %v182
      %v210 = vunpack.c.l.b16 %v185
      %v211 = vpack.c.b16 %v201, %v200
      %v212 = vpack.c.b16 %v203, %v202
      %v213 = vpack.c.b16 %v205, %v204
      %v214 = vpack.c.b16 %v207, %v206
      %v215 = vpack.c.b16 %v209, %v208
      %v216 = vpack.c.b16 %v210, %v210
      %vm217 = vsmask.f32 7424
      %v219 = vshrl.u32 %v211, 16
      %v221 = vshll.u32 %v211, 16
      %v223 = vrot.slane %v221, 1
      %v224 = vor.u32 %v219, %v223
      %v226 = vshll.u32 %v212, 16
      %v228 = vrot.slane %v226, 1
      %v229 = vsel %vm217, %v224, %v228
      %v230 = vshrl.u32 %v212, 16
      %v232 = vor.u32 %v230, %v228
      %v234 = vshll.u32 %v213, 16
      %v236 = vrot.slane %v234, 1
      %v237 = vsel %vm217, %v232, %v236
      %v238 = vshrl.u32 %v213, 16
      %v240 = vor.u32 %v238, %v236
      %v242 = vshll.u32 %v214, 16
      %v244 = vrot.slane %v242, 1
      %v245 = vsel %vm217, %v240, %v244
      %v246 = vshrl.u32 %v214, 16
      %v248 = vor.u32 %v246, %v244
      %v250 = vshll.u32 %v215, 16
      %v252 = vrot.slane %v250, 1
      %v253 = vsel %vm217, %v248, %v252
      %v254 = vshrl.u32 %v215, 16
      %v256 = vor.u32 %v254, %v252
      %v258 = vshll.u32 %v216, 16
      %v260 = vrot.slane %v258, 1
      %v261 = vsel %vm217, %v256, %v260
      %v264 = vunpack.c.l.b16 %v187
      %v265 = vunpack.c.l.b16 %v188
      %v266 = vpack.c.b16 %v265, %v264
      %vm268 = vcmask 130048
      %v270 = vsel %vm268, %v229, 0
      %v273 = vsel %vm268, %v237, 0
      %v276 = vsel %vm268, %v245, 0
      %v279 = vsel %vm268, %v253, 0
      %v282 = vsel %vm268, %v261, 0
      %284 = vmatprep.subr.bf16.mxu0 0
      %285 = vmatpush1.bf16.msra.mxu0 %v266
      %286 = vmatprep.subr.bf16.mxu0 0
      %287 = vmatpush1.bf16.msra.mxu0 0
      %288 = vmatprep.subr.bf16.mxu0 0
      %289 = vmatpush1.bf16.msra.mxu0 0
      %290 = vmatprep.subr.bf16.mxu0 0
      %291 = vmatpush1.bf16.msra.mxu0 0
      %292 = vmatprep.subr.bf16.mxu0 0
      %293 = vmatpush1.bf16.msra.mxu0 0
      %294 = vmatprep.subr.bf16.mxu0 0
      %295 = vmatpush1.bf16.msra.mxu0 0
      %296 = vmatprep.subr.bf16.mxu0 0
      %297 = vmatpush1.bf16.msra.mxu0 0
      %298 = vmatprep.subr.bf16.mxu0 0
      %299 = vmatpush1.bf16.msra.mxu0 0
      %300 = vmatprep.subr.bf16.mxu0 0
      %301 = vmatpush1.bf16.msra.mxu0 0
      %302 = vmatprep.subr.bf16.mxu0 0
      %303 = vmatpush1.bf16.msra.mxu0 0
      %304 = vmatprep.subr.bf16.mxu0 0
      %305 = vmatpush1.bf16.msra.mxu0 0
      %306 = vmatprep.subr.bf16.mxu0 0
      %307 = vmatpush1.bf16.msra.mxu0 0
      %308 = vmatprep.subr.bf16.mxu0 0
      %309 = vmatpush1.bf16.msra.mxu0 0
      %310 = vmatprep.subr.bf16.mxu0 0
      %311 = vmatpush1.bf16.msra.mxu0 0
      %312 = vmatprep.subr.bf16.mxu0 0
      %313 = vmatpush1.bf16.msra.mxu0 0
      %314 = vmatprep.subr.bf16.mxu0 0
      %315 = vmatpush1.bf16.msra.mxu0 0
      %316 = vmatprep.mubr.bf16.mxu0 0
      %317 = vmatmul.mubr.bf16.gmra.mrb[0].mxu0 %v270
      %v318 = vpop.f32.mrb[0].mxu0
      %v319 = vadd.f32 0.0, %v318
      %v320 = vpop.f32.mrb[0].mxu0
      %v321 = vpop.f32.mrb[0].mxu0
      %v322 = vadd.f32 0.0, %v321
      %v323 = vpop.f32.mrb[0].mxu0
      %324 = vmatprep.mubr.bf16.mxu0 0
      %325 = vmatmul.mubr.bf16.gmra.mrb[0].mxu0 %v273
      %v326 = vpop.f32.mrb[0].mxu0
      %v327 = vadd.f32 0.0, %v326
      %v328 = vpop.f32.mrb[0].mxu0
      %v329 = vpop.f32.mrb[0].mxu0
      %v330 = vadd.f32 0.0, %v329
      %v331 = vpop.f32.mrb[0].mxu0
      %332 = vmatprep.mubr.bf16.mxu0 0
      %333 = vmatmul.mubr.bf16.gmra.mrb[0].mxu0 %v276
      %v334 = vpop.f32.mrb[0].mxu0
      %v335 = vadd.f32 0.0, %v334
      %v336 = vpop.f32.mrb[0].mxu0
      %v337 = vpop.f32.mrb[0].mxu0
      %v338 = vadd.f32 0.0, %v337
      %v339 = vpop.f32.mrb[0].mxu0
      %340 = vmatprep.mubr.bf16.mxu0 0
      %341 = vmatmul.mubr.bf16.gmra.mrb[0].mxu0 %v279
      %v342 = vpop.f32.mrb[0].mxu0
      %v343 = vadd.f32 0.0, %v342
      %v344 = vpop.f32.mrb[0].mxu0
      %v345 = vpop.f32.mrb[0].mxu0
      %v346 = vadd.f32 0.0, %v345
      %v347 = vpop.f32.mrb[0].mxu0
      %348 = vmatprep.mubr.bf16.mxu0 0
      %349 = vmatmul.mubr.bf16.gmra.mrb[0].mxu0 %v282
      %v350 = vpop.f32.mrb[0].mxu0
      %v351 = vadd.f32 0.0, %v350
      %v352 = vpop.f32.mrb[0].mxu0
      %v353 = vpop.f32.mrb[0].mxu0
      %v354 = vadd.f32 0.0, %v353
      %v355 = vpop.f32.mrb[0].mxu0
      %356 = vdwg.mxu0
      %v359 = vunpack.c.l.b16 %v183
      %v360 = vunpack.c.l.b16 %v184
      %v361 = vpack.c.b16 %v360, %v359
      %v363 = vsel %vm268, %v211, 0
      %v365 = vsel %vm268, %v212, 0
      %v367 = vsel %vm268, %v213, 0
      %v369 = vsel %vm268, %v214, 0
      %v371 = vsel %vm268, %v215, 0
      %373 = vmatprep.subr.bf16.mxu0 0
      %374 = vmatpush1.bf16.msra.mxu0 %v361
      %375 = vmatprep.subr.bf16.mxu0 0
      %376 = vmatpush1.bf16.msra.mxu0 0
      %377 = vmatprep.subr.bf16.mxu0 0
      %378 = vmatpush1.bf16.msra.mxu0 0
      %379 = vmatprep.subr.bf16.mxu0 0
      %380 = vmatpush1.bf16.msra.mxu0 0
      %381 = vmatprep.subr.bf16.mxu0 0
      %382 = vmatpush1.bf16.msra.mxu0 0
      %383 = vmatprep.subr.bf16.mxu0 0
      %384 = vmatpush1.bf16.msra.mxu0 0
      %385 = vmatprep.subr.bf16.mxu0 0
      %386 = vmatpush1.bf16.msra.mxu0 0
      %387 = vmatprep.subr.bf16.mxu0 0
      %388 = vmatpush1.bf16.msra.mxu0 0
      %389 = vmatprep.subr.bf16.mxu0 0
      %390 = vmatpush1.bf16.msra.mxu0 0
      %391 = vmatprep.subr.bf16.mxu0 0
      %392 = vmatpush1.bf16.msra.mxu0 0
      %393 = vmatprep.subr.bf16.mxu0 0
      %394 = vmatpush1.bf16.msra.mxu0 0
      %395 = vmatprep.subr.bf16.mxu0 0
      %396 = vmatpush1.bf16.msra.mxu0 0
      %397 = vmatprep.subr.bf16.mxu0 0
      %398 = vmatpush1.bf16.msra.mxu0 0
      %399 = vmatprep.subr.bf16.mxu0 0
      %400 = vmatpush1.bf16.msra.mxu0 0
      %401 = vmatprep.subr.bf16.mxu0 0
      %402 = vmatpush1.bf16.msra.mxu0 0
      %403 = vmatprep.subr.bf16.mxu0 0
      %404 = vmatpush1.bf16.msra.mxu0 0
      %405 = vmatprep.mubr.bf16.mxu0 0
      %406 = vmatmul.mubr.bf16.gmra.mrb[0].mxu0 %v363
      %v407 = vpop.f32.mrb[0].mxu0
      %v408 = vadd.f32 %v319, %v407
      %v409 = vpop.f32.mrb[0].mxu0
      %v410 = vpop.f32.mrb[0].mxu0
      %v411 = vadd.f32 %v322, %v410
      %v412 = vpop.f32.mrb[0].mxu0
      %413 = vmatprep.mubr.bf16.mxu0 0
      %414 = vmatmul.mubr.bf16.gmra.mrb[0].mxu0 %v365
      %v415 = vpop.f32.mrb[0].mxu0
      %v416 = vadd.f32 %v327, %v415
      %v417 = vpop.f32.mrb[0].mxu0
      %v418 = vpop.f32.mrb[0].mxu0
      %v419 = vadd.f32 %v330, %v418
      %v420 = vpop.f32.mrb[0].mxu0
      %421 = vmatprep.mubr.bf16.mxu0 0
      %422 = vmatmul.mubr.bf16.gmra.mrb[0].mxu0 %v367
      %v423 = vpop.f32.mrb[0].mxu0
      %v424 = vadd.f32 %v335, %v423
      %v425 = vpop.f32.mrb[0].mxu0
      %v426 = vpop.f32.mrb[0].mxu0
      %v427 = vadd.f32 %v338, %v426
      %v428 = vpop.f32.mrb[0].mxu0
      %429 = vmatprep.mubr.bf16.mxu0 0
      %430 = vmatmul.mubr.bf16.gmra.mrb[0].mxu0 %v369
      %v431 = vpop.f32.mrb[0].mxu0
      %v432 = vadd.f32 %v343, %v431
      %v433 = vpop.f32.mrb[0].mxu0
      %v434 = vpop.f32.mrb[0].mxu0
      %v435 = vadd.f32 %v346, %v434
      %v436 = vpop.f32.mrb[0].mxu0
      %437 = vmatprep.mubr.bf16.mxu0 0
      %438 = vmatmul.mubr.bf16.gmra.mrb[0].mxu0 %v371
      %v439 = vpop.f32.mrb[0].mxu0
      %v440 = vadd.f32 %v351, %v439
      %v441 = vpop.f32.mrb[0].mxu0
      %v442 = vpop.f32.mrb[0].mxu0
      %v443 = vadd.f32 %v354, %v442
      %v444 = vpop.f32.mrb[0].mxu0
      %445 = vdwg.mxu0
      %v446 = vld [vmem:[%s165] sm:$0xe]
      %s447 = scalar_lea.vmem %s1, 16
      %v448 = vld [vmem:[%s447] sm:$0xf]
      %v449 = vld [vmem:[%s447 + $0x4] sm:$0xf]
      %v451 = vunpack.c.l.b16 %v446
      %v452 = vpack.c.b16 %v201, %v451
      %vm453 = vcmask 1046528
      %v454 = vrot.slane %v452, 1
      %v455 = vrot.slane %v212, 1
      %v456 = vsel %vm453, %v454, %v455
      %v457 = vrot.slane %v213, 1
      %v458 = vsel %vm453, %v455, %v457
      %v459 = vrot.slane %v214, 1
      %v460 = vsel %vm453, %v457, %v459
      %v461 = vrot.slane %v215, 1
      %v462 = vsel %vm453, %v459, %v461
      %v463 = vrot.slane %v216, 1
      %v464 = vsel %vm453, %v461, %v463
      %v467 = vunpack.c.l.b16 %v448
      %v468 = vunpack.c.l.b16 %v449
      %v469 = vpack.c.b16 %v468, %v467
      %v472 = vsel %vm268, %v456, 0
      %v475 = vsel %vm268, %v458, 0
      %v478 = vsel %vm268, %v460, 0
      %v481 = vsel %vm268, %v462, 0
      %v484 = vsel %vm268, %v464, 0
      %486 = vmatprep.subr.bf16.mxu0 0
      %487 = vmatpush1.bf16.msra.mxu0 %v469
      %488 = vmatprep.subr.bf16.mxu0 0
      %489 = vmatpush1.bf16.msra.mxu0 0
      %490 = vmatprep.subr.bf16.mxu0 0
      %491 = vmatpush1.bf16.msra.mxu0 0
      %492 = vmatprep.subr.bf16.mxu0 0
      %493 = vmatpush1.bf16.msra.mxu0 0
      %494 = vmatprep.subr.bf16.mxu0 0
      %495 = vmatpush1.bf16.msra.mxu0 0
      %496 = vmatprep.subr.bf16.mxu0 0
      %497 = vmatpush1.bf16.msra.mxu0 0
      %498 = vmatprep.subr.bf16.mxu0 0
      %499 = vmatpush1.bf16.msra.mxu0 0
      %500 = vmatprep.subr.bf16.mxu0 0
      %501 = vmatpush1.bf16.msra.mxu0 0
      %502 = vmatprep.subr.bf16.mxu0 0
      %503 = vmatpush1.bf16.msra.mxu0 0
      %504 = vmatprep.subr.bf16.mxu0 0
      %505 = vmatpush1.bf16.msra.mxu0 0
      %506 = vmatprep.subr.bf16.mxu0 0
      %507 = vmatpush1.bf16.msra.mxu0 0
      %508 = vmatprep.subr.bf16.mxu0 0
      %509 = vmatpush1.bf16.msra.mxu0 0
      %510 = vmatprep.subr.bf16.mxu0 0
      %511 = vmatpush1.bf16.msra.mxu0 0
      %512 = vmatprep.subr.bf16.mxu0 0
      %513 = vmatpush1.bf16.msra.mxu0 0
      %514 = vmatprep.subr.bf16.mxu0 0
      %515 = vmatpush1.bf16.msra.mxu0 0
      %516 = vmatprep.subr.bf16.mxu0 0
      %517 = vmatpush1.bf16.msra.mxu0 0
      %518 = vmatprep.mubr.bf16.mxu0 0
      %519 = vmatmul.mubr.bf16.gmra.mrb[0].mxu0 %v472
      %v520 = vpop.f32.mrb[0].mxu0
      %v521 = vadd.f32 0.0, %v520
      %v522 = vpop.f32.mrb[0].mxu0
      %v523 = vpop.f32.mrb[0].mxu0
      %v524 = vadd.f32 0.0, %v523
      %v525 = vpop.f32.mrb[0].mxu0
      %526 = vmatprep.mubr.bf16.mxu0 0
      %527 = vmatmul.mubr.bf16.gmra.mrb[0].mxu0 %v475
      %v528 = vpop.f32.mrb[0].mxu0
      %v529 = vadd.f32 0.0, %v528
      %v530 = vpop.f32.mrb[0].mxu0
      %v531 = vpop.f32.mrb[0].mxu0
      %v532 = vadd.f32 0.0, %v531
      %v533 = vpop.f32.mrb[0].mxu0
      %534 = vmatprep.mubr.bf16.mxu0 0
      %535 = vmatmul.mubr.bf16.gmra.mrb[0].mxu0 %v478
      %v536 = vpop.f32.mrb[0].mxu0
      %v537 = vadd.f32 0.0, %v536
      %v538 = vpop.f32.mrb[0].mxu0
      %v539 = vpop.f32.mrb[0].mxu0
      %v540 = vadd.f32 0.0, %v539
      %v541 = vpop.f32.mrb[0].mxu0
      %542 = vmatprep.mubr.bf16.mxu0 0
      %543 = vmatmul.mubr.bf16.gmra.mrb[0].mxu0 %v481
      %v544 = vpop.f32.mrb[0].mxu0
      %v545 = vadd.f32 0.0, %v544
      %v546 = vpop.f32.mrb[0].mxu0
      %v547 = vpop.f32.mrb[0].mxu0
      %v548 = vadd.f32 0.0, %v547
      %v549 = vpop.f32.mrb[0].mxu0
      %550 = vmatprep.mubr.bf16.mxu0 0
      %551 = vmatmul.mubr.bf16.gmra.mrb[0].mxu0 %v484
      %v552 = vpop.f32.mrb[0].mxu0
      %v553 = vadd.f32 0.0, %v552
      %v554 = vpop.f32.mrb[0].mxu0
      %v555 = vpop.f32.mrb[0].mxu0
      %v556 = vadd.f32 0.0, %v555
      %v557 = vpop.f32.mrb[0].mxu0
      %558 = vdwg.mxu0
      %v559 = vadd.f32 %v408, %v521
      %v560 = vadd.f32 %v411, %v524
      %v561 = vadd.f32 %v416, %v529
      %v562 = vadd.f32 %v419, %v532
      %v563 = vadd.f32 %v424, %v537
      %v564 = vadd.f32 %v427, %v540
      %v565 = vadd.f32 %v432, %v545
      %v566 = vadd.f32 %v435, %v548
      %v567 = vadd.f32 %v440, %v553
      %v568 = vadd.f32 %v443, %v556
      %v569 = vld [vmem:[%s165 + $0x4] sm:$0xe]
      %v570 = vld [vmem:[%s165 + $0x8] sm:$0xf]
      %v571 = vld [vmem:[%s165 + $0xc] sm:$0xf]
      %v572 = vld [vmem:[%s165 + $0x10] sm:$0xf]
      %v573 = vld [vmem:[%s165 + $0x14] sm:$0xf]
      %v574 = vld [vmem:[%s165 + $0x18] sm:$0xf]
      %v575 = vld [vmem:[%s165 + $0x1c] sm:$0xf]
      %v576 = vld [vmem:[%s165 + $0x20] sm:$0xf]
      %v577 = vld [vmem:[%s165 + $0x24] sm:$0xf]
      %v578 = vld [vmem:[%s165 + $0x28] sm:$0xf]
      %v579 = vld [vmem:[%s165 + $0x2c] sm:$0x1]
      %s580 = scalar_lea.vmem %s1, 24
      %v581 = vld [vmem:[%s580] sm:$0xf]
      %v582 = vld [vmem:[%s580 + $0x4] sm:$0xf]
      %v594 = vunpack.c.l.b16 %v569
      %v595 = vunpack.c.l.b16 %v570
      %v596 = vunpack.c.l.b16 %v571
      %v597 = vunpack.c.l.b16 %v572
      %v598 = vunpack.c.l.b16 %v573
      %v599 = vunpack.c.l.b16 %v574
      %v600 = vunpack.c.l.b16 %v575
      %v601 = vunpack.c.l.b16 %v576
      %v602 = vunpack.c.l.b16 %v577
      %v603 = vunpack.c.l.b16 %v578
      %v604 = vunpack.c.l.b16 %v579
      %v605 = vpack.c.b16 %v595, %v594
      %v606 = vpack.c.b16 %v597, %v596
      %v607 = vpack.c.b16 %v599, %v598
      %v608 = vpack.c.b16 %v601, %v600
      %v609 = vpack.c.b16 %v603, %v602
      %v610 = vpack.c.b16 %v604, %v604
      %v611 = vrot.slane %v605, 1
      %v612 = vrot.slane %v606, 1
      %v613 = vsel %vm453, %v611, %v612
      %v614 = vrot.slane %v607, 1
      %v615 = vsel %vm453, %v612, %v614
      %v616 = vrot.slane %v608, 1
      %v617 = vsel %vm453, %v614, %v616
      %v618 = vrot.slane %v609, 1
      %v619 = vsel %vm453, %v616, %v618
      %v620 = vrot.slane %v610, 1
      %v621 = vsel %vm453, %v618, %v620
      %v624 = vunpack.c.l.b16 %v581
      %v625 = vunpack.c.l.b16 %v582
      %v626 = vpack.c.b16 %v625, %v624
      %v629 = vsel %vm268, %v613, 0
      %v632 = vsel %vm268, %v615, 0
      %v635 = vsel %vm268, %v617, 0
      %v638 = vsel %vm268, %v619, 0
      %v641 = vsel %vm268, %v621, 0
      %643 = vmatprep.subr.bf16.mxu0 0
      %644 = vmatpush1.bf16.msra.mxu0 %v626
      %645 = vmatprep.subr.bf16.mxu0 0
      %646 = vmatpush1.bf16.msra.mxu0 0
      %647 = vmatprep.subr.bf16.mxu0 0
      %648 = vmatpush1.bf16.msra.mxu0 0
      %649 = vmatprep.subr.bf16.mxu0 0
      %650 = vmatpush1.bf16.msra.mxu0 0
      %651 = vmatprep.subr.bf16.mxu0 0
      %652 = vmatpush1.bf16.msra.mxu0 0
      %653 = vmatprep.subr.bf16.mxu0 0
      %654 = vmatpush1.bf16.msra.mxu0 0
      %655 = vmatprep.subr.bf16.mxu0 0
      %656 = vmatpush1.bf16.msra.mxu0 0
      %657 = vmatprep.subr.bf16.mxu0 0
      %658 = vmatpush1.bf16.msra.mxu0 0
      %659 = vmatprep.subr.bf16.mxu0 0
      %660 = vmatpush1.bf16.msra.mxu0 0
      %661 = vmatprep.subr.bf16.mxu0 0
      %662 = vmatpush1.bf16.msra.mxu0 0
      %663 = vmatprep.subr.bf16.mxu0 0
      %664 = vmatpush1.bf16.msra.mxu0 0
      %665 = vmatprep.subr.bf16.mxu0 0
      %666 = vmatpush1.bf16.msra.mxu0 0
      %667 = vmatprep.subr.bf16.mxu0 0
      %668 = vmatpush1.bf16.msra.mxu0 0
      %669 = vmatprep.subr.bf16.mxu0 0
      %670 = vmatpush1.bf16.msra.mxu0 0
      %671 = vmatprep.subr.bf16.mxu0 0
      %672 = vmatpush1.bf16.msra.mxu0 0
      %673 = vmatprep.subr.bf16.mxu0 0
      %674 = vmatpush1.bf16.msra.mxu0 0
      %675 = vmatprep.mubr.bf16.mxu0 0
      %676 = vmatmul.mubr.bf16.gmra.mrb[0].mxu0 %v629
      %v677 = vpop.f32.mrb[0].mxu0
      %v678 = vadd.f32 0.0, %v677
      %v679 = vpop.f32.mrb[0].mxu0
      %v680 = vpop.f32.mrb[0].mxu0
      %v681 = vadd.f32 0.0, %v680
      %v682 = vpop.f32.mrb[0].mxu0
      %683 = vmatprep.mubr.bf16.mxu0 0
      %684 = vmatmul.mubr.bf16.gmra.mrb[0].mxu0 %v632
      %v685 = vpop.f32.mrb[0].mxu0
      %v686 = vadd.f32 0.0, %v685
      %v687 = vpop.f32.mrb[0].mxu0
      %v688 = vpop.f32.mrb[0].mxu0
      %v689 = vadd.f32 0.0, %v688
      %v690 = vpop.f32.mrb[0].mxu0
      %691 = vmatprep.mubr.bf16.mxu0 0
      %692 = vmatmul.mubr.bf16.gmra.mrb[0].mxu0 %v635
      %v693 = vpop.f32.mrb[0].mxu0
      %v694 = vadd.f32 0.0, %v693
      %v695 = vpop.f32.mrb[0].mxu0
      %v696 = vpop.f32.mrb[0].mxu0
      %v697 = vadd.f32 0.0, %v696
      %v698 = vpop.f32.mrb[0].mxu0
      %699 = vmatprep.mubr.bf16.mxu0 0
      %700 = vmatmul.mubr.bf16.gmra.mrb[0].mxu0 %v638
      %v701 = vpop.f32.mrb[0].mxu0
      %v702 = vadd.f32 0.0, %v701
      %v703 = vpop.f32.mrb[0].mxu0
      %v704 = vpop.f32.mrb[0].mxu0
      %v705 = vadd.f32 0.0, %v704
      %v706 = vpop.f32.mrb[0].mxu0
      %707 = vmatprep.mubr.bf16.mxu0 0
      %708 = vmatmul.mubr.bf16.gmra.mrb[0].mxu0 %v641
      %v709 = vpop.f32.mrb[0].mxu0
      %v710 = vadd.f32 0.0, %v709
      %v711 = vpop.f32.mrb[0].mxu0
      %v712 = vpop.f32.mrb[0].mxu0
      %v713 = vadd.f32 0.0, %v712
      %v714 = vpop.f32.mrb[0].mxu0
      %715 = vdwg.mxu0
      %v716 = vadd.f32 %v559, %v678
      %v717 = vadd.f32 %v560, %v681
      %v718 = vadd.f32 %v561, %v686
      %v719 = vadd.f32 %v562, %v689
      %v720 = vadd.f32 %v563, %v694
      %v721 = vadd.f32 %v564, %v697
      %v722 = vadd.f32 %v565, %v702
      %v723 = vadd.f32 %v566, %v705
      %v724 = vadd.f32 %v567, %v710
      %v725 = vadd.f32 %v568, %v713
      %v726 = vld [vmem:[%s165 + $0x2c] sm:$0x3]
      %s727 = scalar_lea.vmem %s1, 32
      %v728 = vld [vmem:[%s727] sm:$0xf]
      %v729 = vld [vmem:[%s727 + $0x4] sm:$0xf]
      %v731 = vunpack.c.l.b16 %v726
      %v732 = vpack.c.b16 %v731, %v731
      %vm733 = vsmask.f32 6400
      %v735 = vshrl.u32 %v605, 16
      %v737 = vrot.slane %v735, 1
      %v738 = vshll.u32 %v605, 16
      %v740 = vrot.slane %v738, 2
      %v741 = vor.u32 %v737, %v740
      %v743 = vshrl.u32 %v606, 16
      %v745 = vrot.slane %v743, 1
      %v746 = vshll.u32 %v606, 16
      %v748 = vrot.slane %v746, 2
      %v749 = vor.u32 %v745, %v748
      %v750 = vsel %vm733, %v741, %v749
      %v752 = vshrl.u32 %v607, 16
      %v754 = vrot.slane %v752, 1
      %v755 = vshll.u32 %v607, 16
      %v757 = vrot.slane %v755, 2
      %v758 = vor.u32 %v754, %v757
      %v759 = vsel %vm733, %v749, %v758
      %v761 = vshrl.u32 %v608, 16
      %v763 = vrot.slane %v761, 1
      %v764 = vshll.u32 %v608, 16
      %v766 = vrot.slane %v764, 2
      %v767 = vor.u32 %v763, %v766
      %v768 = vsel %vm733, %v758, %v767
      %v770 = vshrl.u32 %v609, 16
      %v772 = vrot.slane %v770, 1
      %v773 = vshll.u32 %v609, 16
      %v775 = vrot.slane %v773, 2
      %v776 = vor.u32 %v772, %v775
      %v777 = vsel %vm733, %v767, %v776
      %v779 = vshrl.u32 %v732, 16
      %v781 = vrot.slane %v779, 1
      %v782 = vshll.u32 %v732, 16
      %v784 = vrot.slane %v782, 2
      %v785 = vor.u32 %v781, %v784
      %v786 = vsel %vm733, %v776, %v785
      %v789 = vunpack.c.l.b16 %v728
      %v790 = vunpack.c.l.b16 %v729
      %v791 = vpack.c.b16 %v790, %v789
      %v794 = vsel %vm268, %v750, 0
      %v797 = vsel %vm268, %v759, 0
      %v800 = vsel %vm268, %v768, 0
      %v803 = vsel %vm268, %v777, 0
      %v806 = vsel %vm268, %v786, 0
      %808 = vmatprep.subr.bf16.mxu0 0
      %809 = vmatpush1.bf16.msra.mxu0 %v791
      %810 = vmatprep.subr.bf16.mxu0 0
      %811 = vmatpush1.bf16.msra.mxu0 0
      %812 = vmatprep.subr.bf16.mxu0 0
      %813 = vmatpush1.bf16.msra.mxu0 0
      %814 = vmatprep.subr.bf16.mxu0 0
      %815 = vmatpush1.bf16.msra.mxu0 0
      %816 = vmatprep.subr.bf16.mxu0 0
      %817 = vmatpush1.bf16.msra.mxu0 0
      %818 = vmatprep.subr.bf16.mxu0 0
      %819 = vmatpush1.bf16.msra.mxu0 0
      %820 = vmatprep.subr.bf16.mxu0 0
      %821 = vmatpush1.bf16.msra.mxu0 0
      %822 = vmatprep.subr.bf16.mxu0 0
      %823 = vmatpush1.bf16.msra.mxu0 0
      %824 = vmatprep.subr.bf16.mxu0 0
      %825 = vmatpush1.bf16.msra.mxu0 0
      %826 = vmatprep.subr.bf16.mxu0 0
      %827 = vmatpush1.bf16.msra.mxu0 0
      %828 = vmatprep.subr.bf16.mxu0 0
      %829 = vmatpush1.bf16.msra.mxu0 0
      %830 = vmatprep.subr.bf16.mxu0 0
      %831 = vmatpush1.bf16.msra.mxu0 0
      %832 = vmatprep.subr.bf16.mxu0 0
      %833 = vmatpush1.bf16.msra.mxu0 0
      %834 = vmatprep.subr.bf16.mxu0 0
      %835 = vmatpush1.bf16.msra.mxu0 0
      %836 = vmatprep.subr.bf16.mxu0 0
      %837 = vmatpush1.bf16.msra.mxu0 0
      %838 = vmatprep.subr.bf16.mxu0 0
      %839 = vmatpush1.bf16.msra.mxu0 0
      %840 = vmatprep.mubr.bf16.mxu0 0
      %841 = vmatmul.mubr.bf16.gmra.mrb[0].mxu0 %v794
      %v842 = vpop.f32.mrb[0].mxu0
      %v843 = vadd.f32 0.0, %v842
      %v844 = vpop.f32.mrb[0].mxu0
      %v845 = vpop.f32.mrb[0].mxu0
      %v846 = vadd.f32 0.0, %v845
      %v847 = vpop.f32.mrb[0].mxu0
      %848 = vmatprep.mubr.bf16.mxu0 0
      %849 = vmatmul.mubr.bf16.gmra.mrb[0].mxu0 %v797
      %v850 = vpop.f32.mrb[0].mxu0
      %v851 = vadd.f32 0.0, %v850
      %v852 = vpop.f32.mrb[0].mxu0
      %v853 = vpop.f32.mrb[0].mxu0
      %v854 = vadd.f32 0.0, %v853
      %v855 = vpop.f32.mrb[0].mxu0
      %856 = vmatprep.mubr.bf16.mxu0 0
      %857 = vmatmul.mubr.bf16.gmra.mrb[0].mxu0 %v800
      %v858 = vpop.f32.mrb[0].mxu0
      %v859 = vadd.f32 0.0, %v858
      %v860 = vpop.f32.mrb[0].mxu0
      %v861 = vpop.f32.mrb[0].mxu0
      %v862 = vadd.f32 0.0, %v861
      %v863 = vpop.f32.mrb[0].mxu0
      %864 = vmatprep.mubr.bf16.mxu0 0
      %865 = vmatmul.mubr.bf16.gmra.mrb[0].mxu0 %v803
      %v866 = vpop.f32.mrb[0].mxu0
      %v867 = vadd.f32 0.0, %v866
      %v868 = vpop.f32.mrb[0].mxu0
      %v869 = vpop.f32.mrb[0].mxu0
      %v870 = vadd.f32 0.0, %v869
      %v871 = vpop.f32.mrb[0].mxu0
      %872 = vmatprep.mubr.bf16.mxu0 0
      %873 = vmatmul.mubr.bf16.gmra.mrb[0].mxu0 %v806
      %v874 = vpop.f32.mrb[0].mxu0
      %v875 = vadd.f32 0.0, %v874
      %v876 = vpop.f32.mrb[0].mxu0
      %v877 = vpop.f32.mrb[0].mxu0
      %v878 = vadd.f32 0.0, %v877
      %v879 = vpop.f32.mrb[0].mxu0
      %880 = vdwg.mxu0
      %v881 = vadd.f32 %v716, %v843
      %v882 = vadd.f32 %v717, %v846
      %v883 = vadd.f32 %v718, %v851
      %v884 = vadd.f32 %v719, %v854
      %v885 = vadd.f32 %v720, %v859
      %v886 = vadd.f32 %v721, %v862
      %v887 = vadd.f32 %v722, %v867
      %v888 = vadd.f32 %v723, %v870
      %v889 = vadd.f32 %v724, %v875
      %v890 = vadd.f32 %v725, %v878
      %v891 = vld [vmem:[%s165 + $0x4] sm:$0xc]
      %s892 = scalar_lea.vmem %s1, 40
      %v893 = vld [vmem:[%s892] sm:$0xf]
      %v894 = vld [vmem:[%s892 + $0x4] sm:$0xf]
      %v896 = vunpack.c.l.b16 %v891
      %v897 = vpack.c.b16 %v595, %v896
      %vm898 = vcmask 1045504
      %v899 = vrot.slane %v897, 2
      %v900 = vrot.slane %v606, 2
      %v901 = vsel %vm898, %v899, %v900
      %v902 = vrot.slane %v607, 2
      %v903 = vsel %vm898, %v900, %v902
      %v904 = vrot.slane %v608, 2
      %v905 = vsel %vm898, %v902, %v904
      %v906 = vrot.slane %v609, 2
      %v907 = vsel %vm898, %v904, %v906
      %v908 = vrot.slane %v732, 2
      %v909 = vsel %vm898, %v906, %v908
      %v912 = vunpack.c.l.b16 %v893
      %v913 = vunpack.c.l.b16 %v894
      %v914 = vpack.c.b16 %v913, %v912
      %v917 = vsel %vm268, %v901, 0
      %v920 = vsel %vm268, %v903, 0
      %v923 = vsel %vm268, %v905, 0
      %v926 = vsel %vm268, %v907, 0
      %v929 = vsel %vm268, %v909, 0
      %931 = vmatprep.subr.bf16.mxu0 0
      %932 = vmatpush1.bf16.msra.mxu0 %v914
      %933 = vmatprep.subr.bf16.mxu0 0
      %934 = vmatpush1.bf16.msra.mxu0 0
      %935 = vmatprep.subr.bf16.mxu0 0
      %936 = vmatpush1.bf16.msra.mxu0 0
      %937 = vmatprep.subr.bf16.mxu0 0
      %938 = vmatpush1.bf16.msra.mxu0 0
      %939 = vmatprep.subr.bf16.mxu0 0
      %940 = vmatpush1.bf16.msra.mxu0 0
      %941 = vmatprep.subr.bf16.mxu0 0
      %942 = vmatpush1.bf16.msra.mxu0 0
      %943 = vmatprep.subr.bf16.mxu0 0
      %944 = vmatpush1.bf16.msra.mxu0 0
      %945 = vmatprep.subr.bf16.mxu0 0
      %946 = vmatpush1.bf16.msra.mxu0 0
      %947 = vmatprep.subr.bf16.mxu0 0
      %948 = vmatpush1.bf16.msra.mxu0 0
      %949 = vmatprep.subr.bf16.mxu0 0
      %950 = vmatpush1.bf16.msra.mxu0 0
      %951 = vmatprep.subr.bf16.mxu0 0
      %952 = vmatpush1.bf16.msra.mxu0 0
      %953 = vmatprep.subr.bf16.mxu0 0
      %954 = vmatpush1.bf16.msra.mxu0 0
      %955 = vmatprep.subr.bf16.mxu0 0
      %956 = vmatpush1.bf16.msra.mxu0 0
      %957 = vmatprep.subr.bf16.mxu0 0
      %958 = vmatpush1.bf16.msra.mxu0 0
      %959 = vmatprep.subr.bf16.mxu0 0
      %960 = vmatpush1.bf16.msra.mxu0 0
      %961 = vmatprep.subr.bf16.mxu0 0
      %962 = vmatpush1.bf16.msra.mxu0 0
      %963 = vmatprep.mubr.bf16.mxu0 0
      %964 = vmatmul.mubr.bf16.gmra.mrb[0].mxu0 %v917
      %v965 = vpop.f32.mrb[0].mxu0
      %v966 = vadd.f32 0.0, %v965
      %v967 = vpop.f32.mrb[0].mxu0
      %v968 = vpop.f32.mrb[0].mxu0
      %v969 = vadd.f32 0.0, %v968
      %v970 = vpop.f32.mrb[0].mxu0
      %971 = vmatprep.mubr.bf16.mxu0 0
      %972 = vmatmul.mubr.bf16.gmra.mrb[0].mxu0 %v920
      %v973 = vpop.f32.mrb[0].mxu0
      %v974 = vadd.f32 0.0, %v973
      %v975 = vpop.f32.mrb[0].mxu0
      %v976 = vpop.f32.mrb[0].mxu0
      %v977 = vadd.f32 0.0, %v976
      %v978 = vpop.f32.mrb[0].mxu0
      %979 = vmatprep.mubr.bf16.mxu0 0
      %980 = vmatmul.mubr.bf16.gmra.mrb[0].mxu0 %v923
      %v981 = vpop.f32.mrb[0].mxu0
      %v982 = vadd.f32 0.0, %v981
      %v983 = vpop.f32.mrb[0].mxu0
      %v984 = vpop.f32.mrb[0].mxu0
      %v985 = vadd.f32 0.0, %v984
      %v986 = vpop.f32.mrb[0].mxu0
      %987 = vmatprep.mubr.bf16.mxu0 0
      %988 = vmatmul.mubr.bf16.gmra.mrb[0].mxu0 %v926
      %v989 = vpop.f32.mrb[0].mxu0
      %v990 = vadd.f32 0.0, %v989
      %v991 = vpop.f32.mrb[0].mxu0
      %v992 = vpop.f32.mrb[0].mxu0
      %v993 = vadd.f32 0.0, %v992
      %v994 = vpop.f32.mrb[0].mxu0
      %995 = vmatprep.mubr.bf16.mxu0 0
      %996 = vmatmul.mubr.bf16.gmra.mrb[0].mxu0 %v929
      %v997 = vpop.f32.mrb[0].mxu0
      %v998 = vadd.f32 0.0, %v997
      %v999 = vpop.f32.mrb[0].mxu0
      %v1000 = vpop.f32.mrb[0].mxu0
      %v1001 = vadd.f32 0.0, %v1000
      %v1002 = vpop.f32.mrb[0].mxu0
      %1003 = vdwg.mxu0
      %v1004 = vadd.f32 %v881, %v966
      %v1005 = vadd.f32 %v882, %v969
      %v1006 = vadd.f32 %v883, %v974
      %v1007 = vadd.f32 %v884, %v977
      %v1008 = vadd.f32 %v885, %v982
      %v1009 = vadd.f32 %v886, %v985
      %v1010 = vadd.f32 %v887, %v990
      %v1011 = vadd.f32 %v888, %v993
      %v1012 = vadd.f32 %v889, %v998
      %v1013 = vadd.f32 %v890, %v1001
      %v1014 = vld [vmem:[%s165 + $0x8] sm:$0xc]
      %v1015 = vld [vmem:[%s165 + $0xc] sm:$0xf]
      %v1016 = vld [vmem:[%s165 + $0x10] sm:$0xf]
      %v1017 = vld [vmem:[%s165 + $0x14] sm:$0xf]
      %v1018 = vld [vmem:[%s165 + $0x18] sm:$0xf]
      %v1019 = vld [vmem:[%s165 + $0x1c] sm:$0xf]
      %v1020 = vld [vmem:[%s165 + $0x20] sm:$0xf]
      %v1021 = vld [vmem:[%s165 + $0x24] sm:$0xf]
      %v1022 = vld [vmem:[%s165 + $0x28] sm:$0xf]
      %v1023 = vld [vmem:[%s165 + $0x2c] sm:$0xf]
      %v1024 = vld [vmem:[%s165 + $0x30] sm:$0x3]
      %s1025 = scalar_lea.vmem %s1, 48
      %v1026 = vld [vmem:[%s1025] sm:$0xf]
      %v1027 = vld [vmem:[%s1025 + $0x4] sm:$0xf]
      %v1039 = vunpack.c.l.b16 %v1014
      %v1040 = vunpack.c.l.b16 %v1015
      %v1041 = vunpack.c.l.b16 %v1016
      %v1042 = vunpack.c.l.b16 %v1017
      %v1043 = vunpack.c.l.b16 %v1018
      %v1044 = vunpack.c.l.b16 %v1019
      %v1045 = vunpack.c.l.b16 %v1020
      %v1046 = vunpack.c.l.b16 %v1021
      %v1047 = vunpack.c.l.b16 %v1022
      %v1048 = vunpack.c.l.b16 %v1023
      %v1049 = vunpack.c.l.b16 %v1024
      %v1050 = vpack.c.b16 %v1040, %v1039
      %v1051 = vpack.c.b16 %v1042, %v1041
      %v1052 = vpack.c.b16 %v1044, %v1043
      %v1053 = vpack.c.b16 %v1046, %v1045
      %v1054 = vpack.c.b16 %v1048, %v1047
      %v1055 = vpack.c.b16 %v1049, %v1049
      %v1056 = vrot.slane %v1050, 2
      %v1057 = vrot.slane %v1051, 2
      %v1058 = vsel %vm898, %v1056, %v1057
      %v1059 = vrot.slane %v1052, 2
      %v1060 = vsel %vm898, %v1057, %v1059
      %v1061 = vrot.slane %v1053, 2
      %v1062 = vsel %vm898, %v1059, %v1061
      %v1063 = vrot.slane %v1054, 2
      %v1064 = vsel %vm898, %v1061, %v1063
      %v1065 = vrot.slane %v1055, 2
      %v1066 = vsel %vm898, %v1063, %v1065
      %v1069 = vunpack.c.l.b16 %v1026
      %v1070 = vunpack.c.l.b16 %v1027
      %v1071 = vpack.c.b16 %v1070, %v1069
      %v1074 = vsel %vm268, %v1058, 0
      %v1077 = vsel %vm268, %v1060, 0
      %v1080 = vsel %vm268, %v1062, 0
      %v1083 = vsel %vm268, %v1064, 0
      %v1086 = vsel %vm268, %v1066, 0
      %1088 = vmatprep.subr.bf16.mxu0 0
      %1089 = vmatpush1.bf16.msra.mxu0 %v1071
      %1090 = vmatprep.subr.bf16.mxu0 0
      %1091 = vmatpush1.bf16.msra.mxu0 0
      %1092 = vmatprep.subr.bf16.mxu0 0
      %1093 = vmatpush1.bf16.msra.mxu0 0
      %1094 = vmatprep.subr.bf16.mxu0 0
      %1095 = vmatpush1.bf16.msra.mxu0 0
      %1096 = vmatprep.subr.bf16.mxu0 0
      %1097 = vmatpush1.bf16.msra.mxu0 0
      %1098 = vmatprep.subr.bf16.mxu0 0
      %1099 = vmatpush1.bf16.msra.mxu0 0
      %1100 = vmatprep.subr.bf16.mxu0 0
      %1101 = vmatpush1.bf16.msra.mxu0 0
      %1102 = vmatprep.subr.bf16.mxu0 0
      %1103 = vmatpush1.bf16.msra.mxu0 0
      %1104 = vmatprep.subr.bf16.mxu0 0
      %1105 = vmatpush1.bf16.msra.mxu0 0
      %1106 = vmatprep.subr.bf16.mxu0 0
      %1107 = vmatpush1.bf16.msra.mxu0 0
      %1108 = vmatprep.subr.bf16.mxu0 0
      %1109 = vmatpush1.bf16.msra.mxu0 0
      %1110 = vmatprep.subr.bf16.mxu0 0
      %1111 = vmatpush1.bf16.msra.mxu0 0
      %1112 = vmatprep.subr.bf16.mxu0 0
      %1113 = vmatpush1.bf16.msra.mxu0 0
      %1114 = vmatprep.subr.bf16.mxu0 0
      %1115 = vmatpush1.bf16.msra.mxu0 0
      %1116 = vmatprep.subr.bf16.mxu0 0
      %1117 = vmatpush1.bf16.msra.mxu0 0
      %1118 = vmatprep.subr.bf16.mxu0 0
      %1119 = vmatpush1.bf16.msra.mxu0 0
      %1120 = vmatprep.mubr.bf16.mxu0 0
      %1121 = vmatmul.mubr.bf16.gmra.mrb[0].mxu0 %v1074
      %v1122 = vpop.f32.mrb[0].mxu0
      %v1123 = vadd.f32 0.0, %v1122
      %v1124 = vpop.f32.mrb[0].mxu0
      %v1125 = vpop.f32.mrb[0].mxu0
      %v1126 = vadd.f32 0.0, %v1125
      %v1127 = vpop.f32.mrb[0].mxu0
      %1128 = vmatprep.mubr.bf16.mxu0 0
      %1129 = vmatmul.mubr.bf16.gmra.mrb[0].mxu0 %v1077
      %v1130 = vpop.f32.mrb[0].mxu0
      %v1131 = vadd.f32 0.0, %v1130
      %v1132 = vpop.f32.mrb[0].mxu0
      %v1133 = vpop.f32.mrb[0].mxu0
      %v1134 = vadd.f32 0.0, %v1133
      %v1135 = vpop.f32.mrb[0].mxu0
      %1136 = vmatprep.mubr.bf16.mxu0 0
      %1137 = vmatmul.mubr.bf16.gmra.mrb[0].mxu0 %v1080
      %v1138 = vpop.f32.mrb[0].mxu0
      %v1139 = vadd.f32 0.0, %v1138
      %v1140 = vpop.f32.mrb[0].mxu0
      %v1141 = vpop.f32.mrb[0].mxu0
      %v1142 = vadd.f32 0.0, %v1141
      %v1143 = vpop.f32.mrb[0].mxu0
      %1144 = vmatprep.mubr.bf16.mxu0 0
      %1145 = vmatmul.mubr.bf16.gmra.mrb[0].mxu0 %v1083
      %v1146 = vpop.f32.mrb[0].mxu0
      %v1147 = vadd.f32 0.0, %v1146
      %v1148 = vpop.f32.mrb[0].mxu0
      %v1149 = vpop.f32.mrb[0].mxu0
      %v1150 = vadd.f32 0.0, %v1149
      %v1151 = vpop.f32.mrb[0].mxu0
      %1152 = vmatprep.mubr.bf16.mxu0 0
      %1153 = vmatmul.mubr.bf16.gmra.mrb[0].mxu0 %v1086
      %v1154 = vpop.f32.mrb[0].mxu0
      %v1155 = vadd.f32 0.0, %v1154
      %v1156 = vpop.f32.mrb[0].mxu0
      %v1157 = vpop.f32.mrb[0].mxu0
      %v1158 = vadd.f32 0.0, %v1157
      %v1159 = vpop.f32.mrb[0].mxu0
      %1160 = vdwg.mxu0
      %v1161 = vadd.f32 %v1004, %v1123
      %v1162 = vadd.f32 %v1005, %v1126
      %v1163 = vadd.f32 %v1006, %v1131
      %v1164 = vadd.f32 %v1007, %v1134
      %v1165 = vadd.f32 %v1008, %v1139
      %v1166 = vadd.f32 %v1009, %v1142
      %v1167 = vadd.f32 %v1010, %v1147
      %v1168 = vadd.f32 %v1011, %v1150
      %v1169 = vadd.f32 %v1012, %v1155
      %v1170 = vadd.f32 %v1013, %v1158
      %v1171 = vld [vmem:[%s165 + $0x30] sm:$0x7]
      %s1172 = scalar_lea.vmem %s1, 56
      %v1173 = vld [vmem:[%s1172] sm:$0xf]
      %v1174 = vld [vmem:[%s1172 + $0x4] sm:$0xf]
      %v1176 = vunpack.c.l.b16 %v1171
      %v1177 = vpack.c.b16 %v1176, %v1176
      %vm1178 = vsmask.f32 5376
      %v1180 = vshrl.u32 %v1050, 16
      %v1182 = vrot.slane %v1180, 2
      %v1183 = vshll.u32 %v1050, 16
      %v1185 = vrot.slane %v1183, 3
      %v1186 = vor.u32 %v1182, %v1185
      %v1188 = vshrl.u32 %v1051, 16
      %v1190 = vrot.slane %v1188, 2
      %v1191 = vshll.u32 %v1051, 16
      %v1193 = vrot.slane %v1191, 3
      %v1194 = vor.u32 %v1190, %v1193
      %v1195 = vsel %vm1178, %v1186, %v1194
      %v1197 = vshrl.u32 %v1052, 16
      %v1199 = vrot.slane %v1197, 2
      %v1200 = vshll.u32 %v1052, 16
      %v1202 = vrot.slane %v1200, 3
      %v1203 = vor.u32 %v1199, %v1202
      %v1204 = vsel %vm1178, %v1194, %v1203
      %v1206 = vshrl.u32 %v1053, 16
      %v1208 = vrot.slane %v1206, 2
      %v1209 = vshll.u32 %v1053, 16
      %v1211 = vrot.slane %v1209, 3
      %v1212 = vor.u32 %v1208, %v1211
      %v1213 = vsel %vm1178, %v1203, %v1212
      %v1215 = vshrl.u32 %v1054, 16
      %v1217 = vrot.slane %v1215, 2
      %v1218 = vshll.u32 %v1054, 16
      %v1220 = vrot.slane %v1218, 3
      %v1221 = vor.u32 %v1217, %v1220
      %v1222 = vsel %vm1178, %v1212, %v1221
      %v1224 = vshrl.u32 %v1177, 16
      %v1226 = vrot.slane %v1224, 2
      %v1227 = vshll.u32 %v1177, 16
      %v1229 = vrot.slane %v1227, 3
      %v1230 = vor.u32 %v1226, %v1229
      %v1231 = vsel %vm1178, %v1221, %v1230
      %v1234 = vunpack.c.l.b16 %v1173
      %v1235 = vunpack.c.l.b16 %v1174
      %v1236 = vpack.c.b16 %v1235, %v1234
      %v1239 = vsel %vm268, %v1195, 0
      %v1242 = vsel %vm268, %v1204, 0
      %v1245 = vsel %vm268, %v1213, 0
      %v1248 = vsel %vm268, %v1222, 0
      %v1251 = vsel %vm268, %v1231, 0
      %1253 = vmatprep.subr.bf16.mxu0 0
      %1254 = vmatpush1.bf16.msra.mxu0 %v1236
      %1255 = vmatprep.subr.bf16.mxu0 0
      %1256 = vmatpush1.bf16.msra.mxu0 0
      %1257 = vmatprep.subr.bf16.mxu0 0
      %1258 = vmatpush1.bf16.msra.mxu0 0
      %1259 = vmatprep.subr.bf16.mxu0 0
      %1260 = vmatpush1.bf16.msra.mxu0 0
      %1261 = vmatprep.subr.bf16.mxu0 0
      %1262 = vmatpush1.bf16.msra.mxu0 0
      %1263 = vmatprep.subr.bf16.mxu0 0
      %1264 = vmatpush1.bf16.msra.mxu0 0
      %1265 = vmatprep.subr.bf16.mxu0 0
      %1266 = vmatpush1.bf16.msra.mxu0 0
      %1267 = vmatprep.subr.bf16.mxu0 0
      %1268 = vmatpush1.bf16.msra.mxu0 0
      %1269 = vmatprep.subr.bf16.mxu0 0
      %1270 = vmatpush1.bf16.msra.mxu0 0
      %1271 = vmatprep.subr.bf16.mxu0 0
      %1272 = vmatpush1.bf16.msra.mxu0 0
      %1273 = vmatprep.subr.bf16.mxu0 0
      %1274 = vmatpush1.bf16.msra.mxu0 0
      %1275 = vmatprep.subr.bf16.mxu0 0
      %1276 = vmatpush1.bf16.msra.mxu0 0
      %1277 = vmatprep.subr.bf16.mxu0 0
      %1278 = vmatpush1.bf16.msra.mxu0 0
      %1279 = vmatprep.subr.bf16.mxu0 0
      %1280 = vmatpush1.bf16.msra.mxu0 0
      %1281 = vmatprep.subr.bf16.mxu0 0
      %1282 = vmatpush1.bf16.msra.mxu0 0
      %1283 = vmatprep.subr.bf16.mxu0 0
      %1284 = vmatpush1.bf16.msra.mxu0 0
      %1285 = vmatprep.mubr.bf16.mxu0 0
      %1286 = vmatmul.mubr.bf16.gmra.mrb[0].mxu0 %v1239
      %v1287 = vpop.f32.mrb[0].mxu0
      %v1288 = vadd.f32 0.0, %v1287
      %v1289 = vpop.f32.mrb[0].mxu0
      %v1290 = vpop.f32.mrb[0].mxu0
      %v1291 = vadd.f32 0.0, %v1290
      %v1292 = vpop.f32.mrb[0].mxu0
      %1293 = vmatprep.mubr.bf16.mxu0 0
      %1294 = vmatmul.mubr.bf16.gmra.mrb[0].mxu0 %v1242
      %v1295 = vpop.f32.mrb[0].mxu0
      %v1296 = vadd.f32 0.0, %v1295
      %v1297 = vpop.f32.mrb[0].mxu0
      %v1298 = vpop.f32.mrb[0].mxu0
      %v1299 = vadd.f32 0.0, %v1298
      %v1300 = vpop.f32.mrb[0].mxu0
      %1301 = vmatprep.mubr.bf16.mxu0 0
      %1302 = vmatmul.mubr.bf16.gmra.mrb[0].mxu0 %v1245
      %v1303 = vpop.f32.mrb[0].mxu0
      %v1304 = vadd.f32 0.0, %v1303
      %v1305 = vpop.f32.mrb[0].mxu0
      %v1306 = vpop.f32.mrb[0].mxu0
      %v1307 = vadd.f32 0.0, %v1306
      %v1308 = vpop.f32.mrb[0].mxu0
      %1309 = vmatprep.mubr.bf16.mxu0 0
      %1310 = vmatmul.mubr.bf16.gmra.mrb[0].mxu0 %v1248
      %v1311 = vpop.f32.mrb[0].mxu0
      %v1312 = vadd.f32 0.0, %v1311
      %v1313 = vpop.f32.mrb[0].mxu0
      %v1314 = vpop.f32.mrb[0].mxu0
      %v1315 = vadd.f32 0.0, %v1314
      %v1316 = vpop.f32.mrb[0].mxu0
      %1317 = vmatprep.mubr.bf16.mxu0 0
      %1318 = vmatmul.mubr.bf16.gmra.mrb[0].mxu0 %v1251
      %v1319 = vpop.f32.mrb[0].mxu0
      %v1320 = vadd.f32 0.0, %v1319
      %v1321 = vpop.f32.mrb[0].mxu0
      %v1322 = vpop.f32.mrb[0].mxu0
      %v1323 = vadd.f32 0.0, %v1322
      %v1324 = vpop.f32.mrb[0].mxu0
      %1325 = vdwg.mxu0
      %v1326 = vadd.f32 %v1161, %v1288
      %v1327 = vadd.f32 %v1162, %v1291
      %v1328 = vadd.f32 %v1163, %v1296
      %v1329 = vadd.f32 %v1164, %v1299
      %v1330 = vadd.f32 %v1165, %v1304
      %v1331 = vadd.f32 %v1166, %v1307
      %v1332 = vadd.f32 %v1167, %v1312
      %v1333 = vadd.f32 %v1168, %v1315
      %v1334 = vadd.f32 %v1169, %v1320
      %v1335 = vadd.f32 %v1170, %v1323
      %v1336 = vld [vmem:[%s165 + $0x8] sm:$0x8]
      %s1337 = scalar_lea.vmem %s1, 64
      %v1338 = vld [vmem:[%s1337] sm:$0xf]
      %v1339 = vld [vmem:[%s1337 + $0x4] sm:$0xf]
      %v1341 = vunpack.c.l.b16 %v1336
      %v1342 = vpack.c.b16 %v1040, %v1341
      %vm1343 = vcmask 1044480
      %v1344 = vrot.slane %v1342, 3
      %v1345 = vrot.slane %v1051, 3
      %v1346 = vsel %vm1343, %v1344, %v1345
      %v1347 = vrot.slane %v1052, 3
      %v1348 = vsel %vm1343, %v1345, %v1347
      %v1349 = vrot.slane %v1053, 3
      %v1350 = vsel %vm1343, %v1347, %v1349
      %v1351 = vrot.slane %v1054, 3
      %v1352 = vsel %vm1343, %v1349, %v1351
      %v1353 = vrot.slane %v1177, 3
      %v1354 = vsel %vm1343, %v1351, %v1353
      %v1357 = vunpack.c.l.b16 %v1338
      %v1358 = vunpack.c.l.b16 %v1339
      %v1359 = vpack.c.b16 %v1358, %v1357
      %v1362 = vsel %vm268, %v1346, 0
      %v1365 = vsel %vm268, %v1348, 0
      %v1368 = vsel %vm268, %v1350, 0
      %v1371 = vsel %vm268, %v1352, 0
      %v1374 = vsel %vm268, %v1354, 0
      %1376 = vmatprep.subr.bf16.mxu0 0
      %1377 = vmatpush1.bf16.msra.mxu0 %v1359
      %1378 = vmatprep.subr.bf16.mxu0 0
      %1379 = vmatpush1.bf16.msra.mxu0 0
      %1380 = vmatprep.subr.bf16.mxu0 0
      %1381 = vmatpush1.bf16.msra.mxu0 0
      %1382 = vmatprep.subr.bf16.mxu0 0
      %1383 = vmatpush1.bf16.msra.mxu0 0
      %1384 = vmatprep.subr.bf16.mxu0 0
      %1385 = vmatpush1.bf16.msra.mxu0 0
      %1386 = vmatprep.subr.bf16.mxu0 0
      %1387 = vmatpush1.bf16.msra.mxu0 0
      %1388 = vmatprep.subr.bf16.mxu0 0
      %1389 = vmatpush1.bf16.msra.mxu0 0
      %1390 = vmatprep.subr.bf16.mxu0 0
      %1391 = vmatpush1.bf16.msra.mxu0 0
      %1392 = vmatprep.subr.bf16.mxu0 0
      %1393 = vmatpush1.bf16.msra.mxu0 0
      %1394 = vmatprep.subr.bf16.mxu0 0
      %1395 = vmatpush1.bf16.msra.mxu0 0
      %1396 = vmatprep.subr.bf16.mxu0 0
      %1397 = vmatpush1.bf16.msra.mxu0 0
      %1398 = vmatprep.subr.bf16.mxu0 0
      %1399 = vmatpush1.bf16.msra.mxu0 0
      %1400 = vmatprep.subr.bf16.mxu0 0
      %1401 = vmatpush1.bf16.msra.mxu0 0
      %1402 = vmatprep.subr.bf16.mxu0 0
      %1403 = vmatpush1.bf16.msra.mxu0 0
      %1404 = vmatprep.subr.bf16.mxu0 0
      %1405 = vmatpush1.bf16.msra.mxu0 0
      %1406 = vmatprep.subr.bf16.mxu0 0
      %1407 = vmatpush1.bf16.msra.mxu0 0
      %1408 = vmatprep.mubr.bf16.mxu0 0
      %1409 = vmatmul.mubr.bf16.gmra.mrb[0].mxu0 %v1362
      %v1410 = vpop.f32.mrb[0].mxu0
      %v1411 = vadd.f32 0.0, %v1410
      %v1412 = vpop.f32.mrb[0].mxu0
      %v1413 = vpop.f32.mrb[0].mxu0
      %v1414 = vadd.f32 0.0, %v1413
      %v1415 = vpop.f32.mrb[0].mxu0
      %1416 = vmatprep.mubr.bf16.mxu0 0
      %1417 = vmatmul.mubr.bf16.gmra.mrb[0].mxu0 %v1365
      %v1418 = vpop.f32.mrb[0].mxu0
      %v1419 = vadd.f32 0.0, %v1418
      %v1420 = vpop.f32.mrb[0].mxu0
      %v1421 = vpop.f32.mrb[0].mxu0
      %v1422 = vadd.f32 0.0, %v1421
      %v1423 = vpop.f32.mrb[0].mxu0
      %1424 = vmatprep.mubr.bf16.mxu0 0
      %1425 = vmatmul.mubr.bf16.gmra.mrb[0].mxu0 %v1368
      %v1426 = vpop.f32.mrb[0].mxu0
      %v1427 = vadd.f32 0.0, %v1426
      %v1428 = vpop.f32.mrb[0].mxu0
      %v1429 = vpop.f32.mrb[0].mxu0
      %v1430 = vadd.f32 0.0, %v1429
      %v1431 = vpop.f32.mrb[0].mxu0
      %1432 = vmatprep.mubr.bf16.mxu0 0
      %1433 = vmatmul.mubr.bf16.gmra.mrb[0].mxu0 %v1371
      %v1434 = vpop.f32.mrb[0].mxu0
      %v1435 = vadd.f32 0.0, %v1434
      %v1436 = vpop.f32.mrb[0].mxu0
      %v1437 = vpop.f32.mrb[0].mxu0
      %v1438 = vadd.f32 0.0, %v1437
      %v1439 = vpop.f32.mrb[0].mxu0
      %1440 = vmatprep.mubr.bf16.mxu0 0
      %1441 = vmatmul.mubr.bf16.gmra.mrb[0].mxu0 %v1374
      %v1442 = vpop.f32.mrb[0].mxu0
      %v1443 = vadd.f32 0.0, %v1442
      %v1444 = vpop.f32.mrb[0].mxu0
      %v1445 = vpop.f32.mrb[0].mxu0
      %v1446 = vadd.f32 0.0, %v1445
      %v1447 = vpop.f32.mrb[0].mxu0
      %1448 = vdwg.mxu0
      %v1449 = vadd.f32 %v1326, %v1411
      %v1450 = vadd.f32 %v1327, %v1414
      %v1451 = vadd.f32 %v1328, %v1419
      %v1452 = vadd.f32 %v1329, %v1422
      %v1453 = vadd.f32 %v1330, %v1427
      %v1454 = vadd.f32 %v1331, %v1430
      %v1455 = vadd.f32 %v1332, %v1435
      %v1456 = vadd.f32 %v1333, %v1438
      %v1457 = vadd.f32 %v1334, %v1443
      %v1458 = vadd.f32 %v1335, %v1446
      %v1460 = vlaneseq
      %v1461 = vshrl.u32 %v1460, 7
      %v1462 = vsub.s32 0, %v1461
      %v1463 = vrot.slane %v172, %v1462
      %v1465 = vadd.f32 %v1449, %v1463
      %v1466 = vadd.f32 %v1450, %v1463
      %v1467 = vadd.f32 %v1451, %v1463
      %v1468 = vadd.f32 %v1452, %v1463
      %v1469 = vadd.f32 %v1453, %v1463
      %v1470 = vadd.f32 %v1454, %v1463
      %v1471 = vadd.f32 %v1455, %v1463
      %v1472 = vadd.f32 %v1456, %v1463
      %v1473 = vadd.f32 %v1457, %v1463
      %v1474 = vadd.f32 %v1458, %v1463
      %v1475 = vxor.u32 %v1465, 2147483648
      %v1476 = vxor.u32 %v1466, 2147483648
      %v1477 = vxor.u32 %v1467, 2147483648
      %v1478 = vxor.u32 %v1468, 2147483648
      %v1479 = vxor.u32 %v1469, 2147483648
      %v1480 = vxor.u32 %v1470, 2147483648
      %v1481 = vxor.u32 %v1471, 2147483648
      %v1482 = vxor.u32 %v1472, 2147483648
      %v1483 = vxor.u32 %v1473, 2147483648
      %v1484 = vxor.u32 %v1474, 2147483648
      %v1485 = vmul.f32 %v1475, 1.442695
      %v1486 = vpow.pop %v1485
      %v1487 = vmul.f32 %v1476, 1.442695
      %v1488 = vpow.pop %v1487
      %v1489 = vmul.f32 %v1477, 1.442695
      %v1490 = vpow.pop %v1489
      %v1491 = vmul.f32 %v1478, 1.442695
      %v1492 = vpow.pop %v1491
      %v1493 = vmul.f32 %v1479, 1.442695
      %v1494 = vpow.pop %v1493
      %v1495 = vmul.f32 %v1480, 1.442695
      %v1496 = vpow.pop %v1495
      %v1497 = vmul.f32 %v1481, 1.442695
      %v1498 = vpow.pop %v1497
      %v1499 = vmul.f32 %v1482, 1.442695
      %v1500 = vpow.pop %v1499
      %v1501 = vmul.f32 %v1483, 1.442695
      %v1502 = vpow.pop %v1501
      %v1503 = vmul.f32 %v1484, 1.442695
      %v1504 = vpow.pop %v1503
      %v1505 = vadd.f32 %v1486, 1.0
      %v1506 = vadd.f32 %v1488, 1.0
      %v1507 = vadd.f32 %v1490, 1.0
      %v1508 = vadd.f32 %v1492, 1.0
      %v1509 = vadd.f32 %v1494, 1.0
      %v1510 = vadd.f32 %v1496, 1.0
      %v1511 = vadd.f32 %v1498, 1.0
      %v1512 = vadd.f32 %v1500, 1.0
      %v1513 = vadd.f32 %v1502, 1.0
      %v1514 = vadd.f32 %v1504, 1.0
      %v1515 = vrcp.pop %v1505
      %v1516 = vmul.f32 1.0, %v1515
      %v1517 = vrcp.pop %v1506
      %v1518 = vmul.f32 1.0, %v1517
      %v1519 = vrcp.pop %v1507
      %v1520 = vmul.f32 1.0, %v1519
      %v1521 = vrcp.pop %v1508
      %v1522 = vmul.f32 1.0, %v1521
      %v1523 = vrcp.pop %v1509
      %v1524 = vmul.f32 1.0, %v1523
      %v1525 = vrcp.pop %v1510
      %v1526 = vmul.f32 1.0, %v1525
      %v1527 = vrcp.pop %v1511
      %v1528 = vmul.f32 1.0, %v1527
      %v1529 = vrcp.pop %v1512
      %v1530 = vmul.f32 1.0, %v1529
      %v1531 = vrcp.pop %v1513
      %v1532 = vmul.f32 1.0, %v1531
      %v1533 = vrcp.pop %v1514
      %v1534 = vmul.f32 1.0, %v1533
      %v1535 = vpack.c.bf16 %v1518, %v1516
      %v1536 = vpack.c.bf16 %v1522, %v1520
      %v1537 = vpack.c.bf16 %v1526, %v1524
      %v1538 = vpack.c.bf16 %v1530, %v1528
      %v1539 = vpack.c.bf16 %v1534, %v1532
      %v1545 = vunpack.c.l.b16 %v1535
      %v1546 = vunpack.c.h.b16 %v1535
      %v1547 = vunpack.c.l.b16 %v1536
      %v1548 = vunpack.c.h.b16 %v1536
      %v1549 = vunpack.c.l.b16 %v1537
      %v1550 = vunpack.c.h.b16 %v1537
      %v1551 = vunpack.c.l.b16 %v1538
      %v1552 = vunpack.c.h.b16 %v1538
      %v1553 = vunpack.c.l.b16 %v1539
      %v1554 = vunpack.c.h.b16 %v1539
      %v1555 = vpack.c.b16 %v1545, %v1545
      %v1556 = vpack.c.b16 %v1546, %v1546
      %v1557 = vpack.c.b16 %v1547, %v1547
      %v1558 = vpack.c.b16 %v1548, %v1548
      %v1559 = vpack.c.b16 %v1549, %v1549
      %v1560 = vpack.c.b16 %v1550, %v1550
      %v1561 = vpack.c.b16 %v1551, %v1551
      %v1562 = vpack.c.b16 %v1552, %v1552
      %v1563 = vpack.c.b16 %v1553, %v1553
      %v1564 = vpack.c.b16 %v1554, %v1554
      %1575 = vst [vmem:[%s170] sm:$0xf] %v1555
      %1576 = vst [vmem:[%s170 + $0x4] sm:$0xf] %v1556
      %1577 = vst [vmem:[%s170 + $0x8] sm:$0xf] %v1557
      %1578 = vst [vmem:[%s170 + $0xc] sm:$0xf] %v1558
      %1579 = vst [vmem:[%s170 + $0x10] sm:$0xf] %v1559
      %1580 = vst [vmem:[%s170 + $0x14] sm:$0xf] %v1560
      %1581 = vst [vmem:[%s170 + $0x18] sm:$0xf] %v1561
      %1582 = vst [vmem:[%s170 + $0x1c] sm:$0xf] %v1562
      %1583 = vst [vmem:[%s170 + $0x20] sm:$0xf] %v1563
      %1584 = vst [vmem:[%s170 + $0x24] sm:$0xf] %v1564
      %p1585 = scmp.lt.s32.totalorder %s14, 1
      %s1586 = scalar_select %p1585, %s14, 1
      %s1587 = smul.addr %s1586, 10
      %s1588 = smul.addr %s1587, 4
      %s1589 = scalar_lea.vmem %s3, %s1588
      // Predicated region
      $region33: #{decoder_forward.5} parent=31 // pred_check
        %p1590 = pneg %p100
      $region34: #{decoder_forward.5} parent=31 // pred_check_branch
        %1592 = sbr.rel (%p1590) target = $region36
      $region35: #{decoder_forward.5} parent=31 // pred_region
        _
      $region36: #{decoder_forward.5} parent=31 // pred_fallthru
        _
    $region32: #{decoder_forward.5} parent=5 // pred_fallthru
      _
    %p1593 = scmp.le.s32.totalorder 2, %s9
    // Predicated region
    $region37: #{decoder_forward.5} parent=5 // pred_check
      %p1594 = pneg %p1593
    $region38: #{decoder_forward.5} parent=5 // pred_check_branch
      %1596 = sbr.rel (%p1594) target = $region40
    $region39: #{decoder_forward.5} parent=5 // pred_region
      %s1597 = ssub.s32 %s9, 2
      // Predicated region
      $region41: #{decoder_forward.5} parent=39 // pred_check
        %p1598 = pneg %p106
      $region42: #{decoder_forward.5} parent=39 // pred_check_branch
        %1600 = sbr.rel (%p1598) target = $region44
      $region43: #{decoder_forward.5} parent=39 // pred_region
        %p1601 = scmp.lt.s32.totalorder %s15, 1
        %s1602 = scalar_select %p1601, %s15, 1
        %s1603 = smul.addr %s1602, 10
        %s1604 = smul.addr %s1603, 4
        %s1605 = scalar_lea.vmem %s3, %s1604
      $region44: #{decoder_forward.5} parent=39 // pred_fallthru
        _
    $region40: #{decoder_forward.5} parent=5 // pred_fallthru
      _
  $region6: #{decoder_forward.5} parent=0 // loop_footer
    %s13 = sadd.s32 1, %s9
  $region7: #{decoder_forward.5} parent=0 // loop_footer_branch
    %8 = sbr.rel target = $region3
  $region8: #{decoder_forward.5} parent=0 // loop_exit
    _

</llo_original>
